<compile_context>
chip_gen: v7x
topology: tpu7x:2x2x1
jax: 0.10.0
libtpu: 0.0.40
codegen_flags: <defaults>
</compile_context>

<pallas_src>
import functools

import jax
import jax.numpy as jnp
from jax.experimental import pallas as pl
from jax.experimental.pallas import tpu as pltpu


def _round_up(x, m):
    return ((x + m - 1) // m) * m


def _conv_block_kernel(x_hbm, w_ref, b_ref, o_ref,
                       xbuf, sem, xk, acc,
                       *, k, wp, tile_s, chunk_in, c_in_pad):
    """Grid step = (image n, spatial row-chunk s).

    x_hbm: (N, C_in_pad, S_in)            padded+flattened input, left in HBM (pl.ANY)
    w_ref: (k, C_out, k*C_in_pad)          kw-folded weights, K index = kw*C_in_pad + ci
    b_ref: (C_out, 1)                      f32 bias column
    o_ref: (C_out, TILE_S)                 lane-dense output chunk
    xbuf : (2, C_in_pad, CHUNK_IN)         double-buffered input chunk (+halo)
    sem  : DMA semaphores, shape (2,)
    xk   : (k*C_in_pad, TILE_S+(k-1)*Wp)   kw-stacked slab scratch
    acc  : (C_out, TILE_S) f32             accumulator scratch
    """
    n = pl.program_id(0)
    s = pl.program_id(1)
    n_chunks = pl.num_programs(1)
    slot = s % 2

    def fetch(chunk_idx, slot_idx):
        start = chunk_idx * tile_s
        pltpu.make_async_copy(
            x_hbm.at[n, :, pl.ds(start, chunk_in)],
            xbuf.at[slot_idx],
            sem.at[slot_idx],
        ).start()

    # Prime the double buffer at the first chunk of every image (safe even when the batch
    # axis is sharded across TensorCores: every core starts each image at chunk 0).
    @pl.when(s == 0)
    def _():
        fetch(0, 0)

    # Wait for this chunk's DMA (the src slice here only fixes the descriptor shape).
    pltpu.make_async_copy(
        x_hbm.at[n, :, pl.ds(0, chunk_in)], xbuf.at[slot], sem.at[slot]
    ).wait()

    # Prefetch the next chunk of this image into the other slot while we compute.
    @pl.when(s + 1 < n_chunks)
    def _():
        fetch(s + 1, 1 - slot)

    # Stack the k kw-shifted slabs along the sublane axis.  Only the kw>0 lane shifts are
    # misaligned (k-1 small copies); every downstream read of xk is a 128-aligned view.
    xk_len = xk.shape[1]
    for kw in range(k):
        xk[kw * c_in_pad:(kw + 1) * c_in_pad, :] = xbuf[slot, :, pl.ds(kw, xk_len)]

    # k matmuls with fat K = k*C_in_pad; the per-kh offsets kh*Wp are multiples of 128.
    for kh in range(k):
        part = jnp.dot(w_ref[kh], xk[:, pl.ds(kh * wp, tile_s)],
                       preferred_element_type=jnp.float32)
        if kh == 0:
            acc[...] = part
        else:
            acc[...] += part

    o_ref[...] = jnp.maximum(acc[...] + b_ref[...], 0.0).astype(o_ref.dtype)


def conv_block_forward(x_nchw, weight, bias, *, k=3, padding=1, stride=1,
                       use_bf16=True, tile_rows=None):
    """ConvBlock.forward: relu(conv2d(x) + b).  NCHW in, NCHW out.  stride must be 1.

    use_bf16=True feeds bf16 operands to the MXU (v5e/v6e/v7x all take bf16 at full rate);
    accumulation, bias and output stay f32.
    """
    assert stride == 1, "this kernel implements the module-default stride=1 path"
    N, C_in, H, W = x_nchw.shape
    C_out = weight.shape[0]
    assert weight.shape == (C_out, C_in, k, k) and bias.shape == (C_out,)

    H_out = H + 2 * padding - k + 1
    W_out = W + 2 * padding - k + 1

    op_dtype = jnp.bfloat16 if use_bf16 else jnp.float32
    sublane = 16 if use_bf16 else 8
    c_in_pad = _round_up(C_in, sublane)       # keeps the kw-stacked scratch sublane-aligned

    wp = _round_up(W + 2 * padding, 128)      # 128-aligned padded row stride

    # Output rows per grid step: ~1024 output lanes per chunk (>=512 lanes is already ~85%
    # of HBM roofline per the measured sweep); override via tile_rows for bigger chunks.
    if tile_rows is None:
        tile_rows = max(1, min(H_out, 1024 // wp))
    tile_rows = max(1, min(tile_rows, H_out))
    tile_s = tile_rows * wp
    n_chunks = -(-H_out // tile_rows)
    s_out_pad = n_chunks * tile_s

    chunk_in = tile_s + (k - 1) * wp + 128    # chunk + kh halo + (kw reach rounded to 128)
    s_in_needed = (n_chunks - 1) * tile_s + chunk_in
    total_rows = -(-s_in_needed // wp)
    bottom_rows = total_rows - (H + padding)  # >= padding by construction

    # Single pad pass (bf16 cast fused in): channel pad to the sublane multiple, spatial
    # padding, and enough extra zero rows/cols that every chunk's halo read stays in bounds.
    x_pad = jnp.pad(
        x_nchw.astype(op_dtype),
        ((0, 0), (0, c_in_pad - C_in),
         (padding, bottom_rows), (padding, wp - W - padding)),
    )
    x_flat = x_pad.reshape(N, c_in_pad, total_rows * wp)

    # weight (C_out, C_in, kh, kw) -> (kh, C_out, kw, C_in_pad) -> (k, C_out, k*C_in_pad),
    # so the folded K index is kw*C_in_pad + ci, matching the kw-stacked xk scratch.
    w_fold = jnp.transpose(weight, (2, 0, 3, 1))
    w_fold = jnp.pad(w_fold, ((0, 0), (0, 0), (0, 0), (0, c_in_pad - C_in)))
    w_fold = w_fold.reshape(k, C_out, k * c_in_pad).astype(op_dtype)
    b_col = bias.reshape(C_out, 1).astype(jnp.float32)

    kernel = functools.partial(_conv_block_kernel, k=k, wp=wp, tile_s=tile_s,
                               chunk_in=chunk_in, c_in_pad=c_in_pad)
    xk_len = tile_s + (k - 1) * wp

    out_flat = pl.pallas_call(
        kernel,
        out_shape=jax.ShapeDtypeStruct((N, C_out, s_out_pad), jnp.float32),
        grid_spec=pltpu.PrefetchScalarGridSpec(
            num_scalar_prefetch=0,
            grid=(N, n_chunks),
            in_specs=[
                pl.BlockSpec(memory_space=pl.ANY),                  # x stays in HBM; manual DMA
                pl.BlockSpec((k, C_out, k * c_in_pad), lambda n, s: (0, 0, 0)),
                pl.BlockSpec((C_out, 1), lambda n, s: (0, 0)),
            ],
            out_specs=pl.BlockSpec((None, C_out, tile_s), lambda n, s: (n, 0, s)),
            scratch_shapes=[
                pltpu.VMEM((2, c_in_pad, chunk_in), op_dtype),      # double-buffered input chunk
                pltpu.SemaphoreType.DMA((2,)),
                pltpu.VMEM((k * c_in_pad, xk_len), op_dtype),       # kw-stacked slab
                pltpu.VMEM((C_out, tile_s), jnp.float32),           # f32 accumulator
            ]),
        compiler_params=pltpu.CompilerParams(
            # Batch axis may be sharded across TensorCores; the chunk axis stays in-order so
            # the per-image prefetch chain (primed at chunk 0) is always valid on each core.
            dimension_semantics=("parallel", "arbitrary")),
    )(x_flat, w_fold, b_col)

    # (N, C_out, S_out_pad) -> NCHW crop (no transpose anywhere).
    out = out_flat[:, :, :H_out * wp].reshape(N, C_out, H_out, wp)[:, :, :, :W_out]
    return out


if __name__ == "__main__":
    key = jax.random.PRNGKey(0)
    kx, kw, kb = jax.random.split(key, 3)

    N, C_in, H, W = 2, 4, 16, 16
    C_out, k = 8, 3

    x = jax.random.normal(kx, (N, C_in, H, W), dtype=jnp.float32)
    weight = jax.random.normal(kw, (C_out, C_in, k, k), dtype=jnp.float32) * 0.1
    bias = jax.random.normal(kb, (C_out,), dtype=jnp.float32) * 0.1

    # Reference: XLA conv + bias + relu (same semantics as PyTorch Conv2d + ReLU).
    ref = jax.lax.conv_general_dilated(
        x, weight, window_strides=(1, 1), padding=((1, 1), (1, 1)),
        dimension_numbers=("NCHW", "OIHW", "NCHW"))
    ref = jnp.maximum(ref + bias.reshape(1, C_out, 1, 1), 0.0)

    # f32-operand path.
    out_f32 = jax.block_until_ready(
        conv_block_forward(x, weight, bias, k=3, padding=1, stride=1, use_bf16=False))
    assert out_f32.shape == (N, C_out, H, W)
    assert jnp.allclose(out_f32, ref, atol=2e-2, rtol=2e-2), "f32 path mismatch vs reference"

    # Default bf16-operand path (f32 accumulation) — looser tolerance, expected quantization.
    out_bf16 = jax.block_until_ready(
        conv_block_forward(x, weight, bias, k=3, padding=1, stride=1))
    assert out_bf16.shape == (N, C_out, H, W)
    assert jnp.allclose(out_bf16, ref, atol=6e-2, rtol=6e-2), "bf16 path mismatch vs reference"

    print("KERNEL_OK")
</pallas_src>

<mosaic_0001>
module attributes {stable_mosaic.version = 11 : i64} {
  func.func @_conv_block_kernel(%arg0: i32, %arg1: i32, %arg2: memref<2x8x2432xf32, #tpu.memory_space<any>>, %arg3: memref<3x8x24xf32, #tpu.memory_space<vmem>>, %arg4: memref<8x1xf32, #tpu.memory_space<vmem>>, %arg5: memref<1x8x1024xf32, #tpu.memory_space<vmem>>, %arg6: memref<2x8x1408xf32, #tpu.memory_space<vmem>>, %arg7: memref<2x!tpu.dma_semaphore, #tpu.memory_space<semaphore_mem>>, %arg8: memref<24x1280xf32, #tpu.memory_space<vmem>>, %arg9: memref<8x1024xf32, #tpu.memory_space<vmem>>) attributes {dimension_semantics = [#tpu.dimension_semantics<parallel>, #tpu.dimension_semantics<arbitrary>], iteration_bounds = array<i64: 2, 2>, scalar_prefetch = 0 : i64, scratch_operands = 4 : i64, tpu.core_type = #tpu.core_type<tc>, window_params = [{}, {pipeline_mode = #tpu.pipeline_mode<synchronous>, transform_indices = @transform_1, window_bounds = array<i64: 3, 8, 24>}, {pipeline_mode = #tpu.pipeline_mode<synchronous>, transform_indices = @transform_2, window_bounds = array<i64: 8, 1>}, {transform_indices = @transform_3, window_bounds = array<i64: 1, 8, 1024>}]} {
    %c2_i32 = arith.constant 2 : i32
    %c0_i32 = arith.constant 0 : i32
    %0 = arith.cmpi eq, %c2_i32, %c0_i32 : i32
    %c1_i32 = arith.constant 1 : i32
    %1 = arith.select %0, %c1_i32, %c2_i32 : i32
    %2 = arith.remsi %arg1, %1 : i32
    %c0_i32_0 = arith.constant 0 : i32
    %3 = arith.cmpi ne, %2, %c0_i32_0 : i32
    %c0_i32_1 = arith.constant 0 : i32
    %4 = arith.cmpi slt, %2, %c0_i32_1 : i32
    %c0_i32_2 = arith.constant 0 : i32
    %5 = arith.cmpi slt, %1, %c0_i32_2 : i32
    %6 = arith.xori %4, %5 : i1
    %7 = arith.andi %6, %3 : i1
    %8 = arith.addi %2, %1 : i32
    %9 = arith.select %7, %8, %2 : i32
    %c0_i32_3 = arith.constant 0 : i32
    %10 = arith.cmpi eq, %arg1, %c0_i32_3 : i32
    %11 = arith.extui %10 : i1 to i32
    %c0_i32_4 = arith.constant 0 : i32
    %12 = arith.cmpi ne, %11, %c0_i32_4 : i32
    scf.if %12 {
      %c0_i32_52 = arith.constant 0 : i32
      %c0_i32_53 = arith.constant 0 : i32
      %c0_i32_54 = arith.constant 0 : i32
      %c0_i32_55 = arith.constant 0 : i32
      %63 = tpu.memref_slice %arg2[%arg0, %c0_i32_54, %c0_i32_55] : memref<2x8x2432xf32, #tpu.memory_space<any>> -> memref<1x8x1408xf32, #tpu.memory_space<any>>
      %64 = tpu.memref_squeeze %63 : memref<1x8x1408xf32, #tpu.memory_space<any>> -> memref<8x1408xf32, #tpu.memory_space<any>>
      %c0_i32_56 = arith.constant 0 : i32
      %c0_i32_57 = arith.constant 0 : i32
      %65 = tpu.memref_slice %arg6[%c0_i32_52, %c0_i32_56, %c0_i32_57] : memref<2x8x1408xf32, #tpu.memory_space<vmem>> -> memref<1x8x1408xf32, #tpu.memory_space<vmem>>
      %66 = tpu.memref_squeeze %65 : memref<1x8x1408xf32, #tpu.memory_space<vmem>> -> memref<8x1408xf32, #tpu.memory_space<vmem>>
      %67 = tpu.memref_slice %arg7[%c0_i32_53] : memref<2x!tpu.dma_semaphore, #tpu.memory_space<semaphore_mem>> -> memref<1x!tpu.dma_semaphore, #tpu.memory_space<semaphore_mem>>
      %68 = tpu.memref_squeeze %67 : memref<1x!tpu.dma_semaphore, #tpu.memory_space<semaphore_mem>> -> memref<!tpu.dma_semaphore, #tpu.memory_space<semaphore_mem>>
      tpu.enqueue_dma source(%64 : memref<8x1408xf32, #tpu.memory_space<any>>) target(%66 : memref<8x1408xf32, #tpu.memory_space<vmem>>) target_semaphore(%68 : memref<!tpu.dma_semaphore, #tpu.memory_space<semaphore_mem>>)
    } else {
    }
    %c0_i32_5 = arith.constant 0 : i32
    %c0_i32_6 = arith.constant 0 : i32
    %13 = tpu.memref_slice %arg2[%arg0, %c0_i32_5, %c0_i32_6] : memref<2x8x2432xf32, #tpu.memory_space<any>> -> memref<1x8x1408xf32, #tpu.memory_space<any>>
    %14 = tpu.memref_squeeze %13 : memref<1x8x1408xf32, #tpu.memory_space<any>> -> memref<8x1408xf32, #tpu.memory_space<any>>
    %c0_i32_7 = arith.constant 0 : i32
    %c0_i32_8 = arith.constant 0 : i32
    %15 = tpu.memref_slice %arg6[%9, %c0_i32_7, %c0_i32_8] : memref<2x8x1408xf32, #tpu.memory_space<vmem>> -> memref<1x8x1408xf32, #tpu.memory_space<vmem>>
    %16 = tpu.memref_squeeze %15 : memref<1x8x1408xf32, #tpu.memory_space<vmem>> -> memref<8x1408xf32, #tpu.memory_space<vmem>>
    %17 = tpu.memref_slice %arg7[%9] : memref<2x!tpu.dma_semaphore, #tpu.memory_space<semaphore_mem>> -> memref<1x!tpu.dma_semaphore, #tpu.memory_space<semaphore_mem>>
    %18 = tpu.memref_squeeze %17 : memref<1x!tpu.dma_semaphore, #tpu.memory_space<semaphore_mem>> -> memref<!tpu.dma_semaphore, #tpu.memory_space<semaphore_mem>>
    tpu.wait_dma2 semaphore(%18 : memref<!tpu.dma_semaphore, #tpu.memory_space<semaphore_mem>>) src(%14 : memref<8x1408xf32, #tpu.memory_space<any>>) dst(%16 : memref<8x1408xf32, #tpu.memory_space<vmem>>)
    %c1_i32_9 = arith.constant 1 : i32
    %19 = arith.addi %arg1, %c1_i32_9 : i32
    %c2_i32_10 = arith.constant 2 : i32
    %20 = arith.cmpi slt, %19, %c2_i32_10 : i32
    %21 = arith.extui %20 : i1 to i32
    %c0_i32_11 = arith.constant 0 : i32
    %22 = arith.cmpi ne, %21, %c0_i32_11 : i32
    scf.if %22 {
      %c1_i32_52 = arith.constant 1 : i32
      %63 = arith.addi %arg1, %c1_i32_52 : i32
      %c1_i32_53 = arith.constant 1 : i32
      %64 = arith.subi %c1_i32_53, %9 : i32
      %c1024_i32 = arith.constant 1024 : i32
      %65 = arith.muli %63, %c1024_i32 : i32
      %c0_i32_54 = arith.constant 0 : i32
      %66 = tpu.memref_slice %arg2[%arg0, %c0_i32_54, %65] : memref<2x8x2432xf32, #tpu.memory_space<any>> -> memref<1x8x1408xf32, #tpu.memory_space<any>>
      %67 = tpu.memref_squeeze %66 : memref<1x8x1408xf32, #tpu.memory_space<any>> -> memref<8x1408xf32, #tpu.memory_space<any>>
      %c0_i32_55 = arith.constant 0 : i32
      %c0_i32_56 = arith.constant 0 : i32
      %68 = tpu.memref_slice %arg6[%64, %c0_i32_55, %c0_i32_56] : memref<2x8x1408xf32, #tpu.memory_space<vmem>> -> memref<1x8x1408xf32, #tpu.memory_space<vmem>>
      %69 = tpu.memref_squeeze %68 : memref<1x8x1408xf32, #tpu.memory_space<vmem>> -> memref<8x1408xf32, #tpu.memory_space<vmem>>
      %70 = tpu.memref_slice %arg7[%64] : memref<2x!tpu.dma_semaphore, #tpu.memory_space<semaphore_mem>> -> memref<1x!tpu.dma_semaphore, #tpu.memory_space<semaphore_mem>>
      %71 = tpu.memref_squeeze %70 : memref<1x!tpu.dma_semaphore, #tpu.memory_space<semaphore_mem>> -> memref<!tpu.dma_semaphore, #tpu.memory_space<semaphore_mem>>
      tpu.enqueue_dma source(%67 : memref<8x1408xf32, #tpu.memory_space<any>>) target(%69 : memref<8x1408xf32, #tpu.memory_space<vmem>>) target_semaphore(%71 : memref<!tpu.dma_semaphore, #tpu.memory_space<semaphore_mem>>)
    } else {
    }
    %23 = arith.index_cast %9 : i32 to index
    %c0 = arith.constant 0 : index
    %c0_12 = arith.constant 0 : index
    %24 = vector.load %arg6[%23, %c0, %c0_12] : memref<2x8x1408xf32, #tpu.memory_space<vmem>>, vector<1x8x1280xf32>
    %25 = vector.shape_cast %24 : vector<1x8x1280xf32> to vector<8x1280xf32>
    %c0_13 = arith.constant 0 : index
    %c0_14 = arith.constant 0 : index
    %26 = vector.load %arg8[%c0_13, %c0_14] : memref<24x1280xf32, #tpu.memory_space<vmem>>, vector<8x1280xf32>
    tpu.vector_store %arg8[%c0_13, %c0_14], %25 {strides = array<i32>} : memref<24x1280xf32, #tpu.memory_space<vmem>>, vector<8x1280xf32>,
    %27 = arith.index_cast %9 : i32 to index
    %c0_15 = arith.constant 0 : index
    %c1 = arith.constant 1 : index
    %28 = vector.load %arg6[%27, %c0_15, %c1] : memref<2x8x1408xf32, #tpu.memory_space<vmem>>, vector<1x8x1280xf32>
    %29 = vector.shape_cast %28 : vector<1x8x1280xf32> to vector<8x1280xf32>
    %c8 = arith.constant 8 : index
    %c0_16 = arith.constant 0 : index
    %30 = vector.load %arg8[%c8, %c0_16] : memref<24x1280xf32, #tpu.memory_space<vmem>>, vector<8x1280xf32>
    tpu.vector_store %arg8[%c8, %c0_16], %29 {strides = array<i32>} : memref<24x1280xf32, #tpu.memory_space<vmem>>, vector<8x1280xf32>,
    %31 = arith.index_cast %9 : i32 to index
    %c0_17 = arith.constant 0 : index
    %c2 = arith.constant 2 : index
    %32 = vector.load %arg6[%31, %c0_17, %c2] : memref<2x8x1408xf32, #tpu.memory_space<vmem>>, vector<1x8x1280xf32>
    %33 = vector.shape_cast %32 : vector<1x8x1280xf32> to vector<8x1280xf32>
    %c16 = arith.constant 16 : index
    %c0_18 = arith.constant 0 : index
    %34 = vector.load %arg8[%c16, %c0_18] : memref<24x1280xf32, #tpu.memory_space<vmem>>, vector<8x1280xf32>
    tpu.vector_store %arg8[%c16, %c0_18], %33 {strides = array<i32>} : memref<24x1280xf32, #tpu.memory_space<vmem>>, vector<8x1280xf32>,
    %c0_19 = arith.constant 0 : index
    %c0_20 = arith.constant 0 : index
    %c0_21 = arith.constant 0 : index
    %35 = vector.load %arg3[%c0_19, %c0_20, %c0_21] : memref<3x8x24xf32, #tpu.memory_space<vmem>>, vector<1x8x24xf32>
    %36 = vector.shape_cast %35 : vector<1x8x24xf32> to vector<8x24xf32>
    %c0_22 = arith.constant 0 : index
    %c0_23 = arith.constant 0 : index
    %37 = vector.load %arg8[%c0_22, %c0_23] : memref<24x1280xf32, #tpu.memory_space<vmem>>, vector<24x1024xf32>
    %cst = arith.constant dense<0.000000e+00> : vector<8x1024xf32>
    %38 = tpu.matmul %36, %37, %cst {dimension_numbers = #tpu.dot_dimension_numbers<[1], [0], [0], [1], [0, 0, 1, 1], [], []>} : vector<8x24xf32>, vector<24x1024xf32>, vector<8x1024xf32> -> vector<8x1024xf32>
    %c0_24 = arith.constant 0 : index
    %c0_25 = arith.constant 0 : index
    %39 = vector.load %arg9[%c0_24, %c0_25] : memref<8x1024xf32, #tpu.memory_space<vmem>>, vector<8x1024xf32>
    tpu.vector_store %arg9[%c0_24, %c0_25], %38 {strides = array<i32>} : memref<8x1024xf32, #tpu.memory_space<vmem>>, vector<8x1024xf32>,
    %c1_26 = arith.constant 1 : index
    %c0_27 = arith.constant 0 : index
    %c0_28 = arith.constant 0 : index
    %40 = vector.load %arg3[%c1_26, %c0_27, %c0_28] : memref<3x8x24xf32, #tpu.memory_space<vmem>>, vector<1x8x24xf32>
    %41 = vector.shape_cast %40 : vector<1x8x24xf32> to vector<8x24xf32>
    %c0_29 = arith.constant 0 : index
    %c128 = arith.constant 128 : index
    %42 = vector.load %arg8[%c0_29, %c128] : memref<24x1280xf32, #tpu.memory_space<vmem>>, vector<24x1024xf32>
    %cst_30 = arith.constant dense<0.000000e+00> : vector<8x1024xf32>
    %43 = tpu.matmul %41, %42, %cst_30 {dimension_numbers = #tpu.dot_dimension_numbers<[1], [0], [0], [1], [0, 0, 1, 1], [], []>} : vector<8x24xf32>, vector<24x1024xf32>, vector<8x1024xf32> -> vector<8x1024xf32>
    %c0_31 = arith.constant 0 : index
    %c0_32 = arith.constant 0 : index
    %44 = vector.load %arg9[%c0_31, %c0_32] : memref<8x1024xf32, #tpu.memory_space<vmem>>, vector<8x1024xf32>
    %45 = arith.addf %44, %43 : vector<8x1024xf32>
    %c0_33 = arith.constant 0 : index
    %c0_34 = arith.constant 0 : index
    %46 = vector.load %arg9[%c0_33, %c0_34] : memref<8x1024xf32, #tpu.memory_space<vmem>>, vector<8x1024xf32>
    tpu.vector_store %arg9[%c0_33, %c0_34], %45 {strides = array<i32>} : memref<8x1024xf32, #tpu.memory_space<vmem>>, vector<8x1024xf32>,
    %c2_35 = arith.constant 2 : index
    %c0_36 = arith.constant 0 : index
    %c0_37 = arith.constant 0 : index
    %47 = vector.load %arg3[%c2_35, %c0_36, %c0_37] : memref<3x8x24xf32, #tpu.memory_space<vmem>>, vector<1x8x24xf32>
    %48 = vector.shape_cast %47 : vector<1x8x24xf32> to vector<8x24xf32>
    %c0_38 = arith.constant 0 : index
    %c256 = arith.constant 256 : index
    %49 = vector.load %arg8[%c0_38, %c256] : memref<24x1280xf32, #tpu.memory_space<vmem>>, vector<24x1024xf32>
    %cst_39 = arith.constant dense<0.000000e+00> : vector<8x1024xf32>
    %50 = tpu.matmul %48, %49, %cst_39 {dimension_numbers = #tpu.dot_dimension_numbers<[1], [0], [0], [1], [0, 0, 1, 1], [], []>} : vector<8x24xf32>, vector<24x1024xf32>, vector<8x1024xf32> -> vector<8x1024xf32>
    %c0_40 = arith.constant 0 : index
    %c0_41 = arith.constant 0 : index
    %51 = vector.load %arg9[%c0_40, %c0_41] : memref<8x1024xf32, #tpu.memory_space<vmem>>, vector<8x1024xf32>
    %52 = arith.addf %51, %50 : vector<8x1024xf32>
    %c0_42 = arith.constant 0 : index
    %c0_43 = arith.constant 0 : index
    %53 = vector.load %arg9[%c0_42, %c0_43] : memref<8x1024xf32, #tpu.memory_space<vmem>>, vector<8x1024xf32>
    tpu.vector_store %arg9[%c0_42, %c0_43], %52 {strides = array<i32>} : memref<8x1024xf32, #tpu.memory_space<vmem>>, vector<8x1024xf32>,
    %c0_44 = arith.constant 0 : index
    %c0_45 = arith.constant 0 : index
    %54 = vector.load %arg9[%c0_44, %c0_45] : memref<8x1024xf32, #tpu.memory_space<vmem>>, vector<8x1024xf32>
    %c0_46 = arith.constant 0 : index
    %c0_47 = arith.constant 0 : index
    %55 = vector.load %arg4[%c0_46, %c0_47] : memref<8x1xf32, #tpu.memory_space<vmem>>, vector<8x1xf32>
    %56 = vector.broadcast %55 : vector<8x1xf32> to vector<8x1024xf32>
    %57 = arith.addf %54, %56 : vector<8x1024xf32>
    %cst_48 = arith.constant 0.000000e+00 : f32
    %58 = vector.broadcast %cst_48 : f32 to vector<8x1024xf32>
    %59 = arith.maximumf %57, %58 : vector<8x1024xf32>
    %c0_49 = arith.constant 0 : index
    %c0_50 = arith.constant 0 : index
    %c0_51 = arith.constant 0 : index
    %60 = vector.load %arg5[%c0_49, %c0_50, %c0_51] : memref<1x8x1024xf32, #tpu.memory_space<vmem>>, vector<1x8x1024xf32>
    %61 = vector.shape_cast %60 : vector<1x8x1024xf32> to vector<8x1024xf32>
    %62 = vector.shape_cast %59 : vector<8x1024xf32> to vector<1x8x1024xf32>
    tpu.vector_store %arg5[%c0_49, %c0_50, %c0_51], %62 {strides = array<i32>} : memref<1x8x1024xf32, #tpu.memory_space<vmem>>, vector<1x8x1024xf32>,
    return
  }
  func.func @transform_1(%arg0: i32, %arg1: i32) -> (i32, i32, i32) {
    %c0_i32 = arith.constant 0 : i32
    %c0_i32_0 = arith.constant 0 : i32
    %c0_i32_1 = arith.constant 0 : i32
    %c0_i32_2 = arith.constant 0 : i32
    return %c0_i32, %c0_i32_0, %c0_i32_1 : i32, i32, i32
  }
  func.func @transform_2(%arg0: i32, %arg1: i32) -> (i32, i32) {
    %c0_i32 = arith.constant 0 : i32
    %c0_i32_0 = arith.constant 0 : i32
    %c0_i32_1 = arith.constant 0 : i32
    return %c0_i32, %c0_i32_0 : i32, i32
  }
  func.func @transform_3(%arg0: i32, %arg1: i32) -> (i32, i32, i32) {
    %c0_i32 = arith.constant 0 : i32
    %c0_i32_0 = arith.constant 0 : i32
    return %arg0, %c0_i32, %arg1 : i32, i32, i32
  }
}

</mosaic_0001>

<llo_original>
// kernel: tpu_custom_call.1
$region0: #{tpu_custom_call.1}
  #allocation0 [shape = 'u32[]', space=smem, size = 0x4, offset = 0x4, fixed_abs, tag = 'smem constant byte address 0x4 - core index']
  #allocation1 [shape = 'u32[144,128]{1,0:T(1,128)}', space=vmem, size = 0x12000, scoped, tag = 'internal scratch']
  #allocation2 [shape = 'f32[2,8,1408]{2,1,0:T(8,128)}', space=vmem, size = 0x16000, scoped, tag = 'scratch operand']
  #allocation3 [shape = 's32[2]{0}', space=sflag, size = 0x8, scoped, tag = 'scratch operand']
  #allocation4 [shape = 'f32[24,1280]{1,0:T(8,128)}', space=vmem, size = 0x1e000, scoped, tag = 'scratch operand']
  #allocation5 [shape = 'f32[8,1024]{1,0:T(8,128)}', space=vmem, size = 0x8000, scoped, tag = 'scratch operand']
  #allocation10 [shape = 's32[]', space=sflag, size = 0x4, offset = 0, fixed_abs, tag = 'sflag constant byte address 0x0 - dummy sync flag']
  #allocation11 [shape = 's32[]', space=sflag, size = 0x4, offset = 0, fixed_abs, tag = 'sflag constant byte address 0x0 - dummy sync flag']
  #allocation12 [shape = 'u32[]', space=smem, size = 0x4, offset = 0x44, fixed_abs, tag = 'smem constant byte address 0x44 - assertion arg 0']
  #allocation13 [shape = 'u32[]', space=smem, size = 0x4, offset = 0x48, fixed_abs, tag = 'smem constant byte address 0x48 - assertion arg 1']
  #allocation14 [shape = 's32[]', space=sflag, size = 0x4, offset = 0, fixed_abs, tag = 'sflag constant byte address 0x0 - dummy sync flag']
  #allocation15 [shape = 's32[]', space=sflag, size = 0x4, offset = 0, fixed_abs, tag = 'sflag constant byte address 0x0 - dummy sync flag']
  %s0 = inlined_call_operand.hbm [shape: f32[2,8,2432], index: 0, kind: input, shape index: {}]
  %s1 = inlined_call_operand.hbm [shape: f32[3,8,24], index: 1, kind: input, shape index: {}]
  %s2 = inlined_call_operand.vmem [shape: f32[8,1], index: 2, kind: input, shape index: {}]
  %s3 = inlined_call_operand.hbm [shape: f32[2,8,2048], index: 3, kind: output, shape index: {}]
  %s4 = sld [smem:[#allocation0]]
  $region61: #{tpu_custom_call.1} parent=0
    _
  %s6 = ssub.s32 1, %s4
  %s7 = scalar_select 0, %s6, %s4
  $region1: #{tpu_custom_call.1} parent=0
    #allocation6 [shape = 'u8[12288]{0}', space=vmem, size = 0x3000, scoped, tag = 'input window, operand 1, single buffered']
    #allocation7 [shape = 's32[2]{0}', space=sflag, size = 0x8, scoped, tag = 'scoped memory for tpu_custom_call.1']
    #allocation8 [shape = 's32[2]{0}', space=sflag, size = 0x8, scoped, tag = 'scoped memory for tpu_custom_call.1']
    #allocation9 [shape = 'u8[65536]{0}', space=vmem, size = 0x10000, scoped, tag = 'output window, operand 0']
    %8 = vsyncpa [#allocation7], 0
    %9 = vsyncpa [#allocation8], 0
    %s10 = scalar_lea.sflag [#allocation8], 1
    %11 = vsyncpa %s10, 0
    loop: start=0, step=1, limit=6
    $region2: #{tpu_custom_call.1} parent=1 // loop_pre_header
      _
    $region3: #{tpu_custom_call.1} parent=1 // loop_header
      %s13 = sphi 0, %s17
      %p14 = scmp.ge.s32.totalorder %s13, 6
      %s20 = sphi 0, %s32
      %s21 = sphi 0, %s28
      %s22 = sphi 0, %s20
      %s23 = sphi 0, %s21
      %s24 = sphi 0, %s22
      %s25 = sphi 0, %s23
      %s33 = sphi 0, %s33
      %s35 = sphi 0, %s33
      %s36 = sphi 0, %s35
      %s50 = sphi 0, %s36
      %s54 = sphi 0, %s54
      %s56 = sphi 0, %s54
      %s57 = sphi 0, %s56
      %s71 = sphi 0, %s57
      %s79 = sphi 0, %s81
      %s82 = sphi 0, %s79
      %s83 = sphi 0, %s82
      %s99 = sphi 0, %s83
    $region4: #{tpu_custom_call.1} parent=1 // loop_header_branch
      %16 = sbr.rel (%p14) target = $region8
    $region5: #{tpu_custom_call.1} parent=1 // loop_body
      %s18 = ssub.s32 %s13, 1
      %s19 = ssub.s32 %s13, 2
      %s26 = sadd.s32 1, %s21
      %p27 = scmp.ge.s32.totalorder %s26, 2
      %s28 = scalar_select %p27, 0, %s26
      %s29 = sadd.s32 1, %s20
      %s30 = scalar_select %p27, %s29, %s20
      %p31 = scmp.ge.s32.totalorder %s30, 2
      %s32 = scalar_select %p31, 0, %s30
      %s34 = sadd.s32 %s33, 1
      %p37 = scmp.eq.s32.totalorder %s13, 3
      %p38 = scmp.ne.s32.totalorder %s33, %s35
      %p39 = scmp.eq.s32.totalorder %s13, 0
      %p40 = por %p38, %p39
      %p41 = scmp.ne.s32.totalorder %s33, %s35
      %p42 = scmp.eq.s32.totalorder %s18, 3
      %p43 = por %p41, %p42
      %p44 = scmp.ne.s32.totalorder %s35, %s36
      %p45 = scmp.eq.s32.totalorder %s18, 0
      %p46 = por %p44, %p45
      %p47 = scmp.ne.s32.totalorder %s35, %s36
      %p48 = scmp.eq.s32.totalorder %s19, 3
      %p49 = por %p47, %p48
      %p51 = scmp.ne.s32.totalorder %s36, %s50
      %p52 = scmp.eq.s32.totalorder %s19, 0
      %p53 = por %p51, %p52
      %s55 = sadd.s32 %s54, 1
      %p58 = scmp.eq.s32.totalorder %s13, 3
      %p59 = scmp.ne.s32.totalorder %s54, %s56
      %p60 = scmp.eq.s32.totalorder %s13, 0
      %p61 = por %p59, %p60
      %p62 = scmp.ne.s32.totalorder %s54, %s56
      %p63 = scmp.eq.s32.totalorder %s18, 3
      %p64 = por %p62, %p63
      %p65 = scmp.ne.s32.totalorder %s56, %s57
      %p66 = scmp.eq.s32.totalorder %s18, 0
      %p67 = por %p65, %p66
      %p68 = scmp.ne.s32.totalorder %s56, %s57
      %p69 = scmp.eq.s32.totalorder %s19, 3
      %p70 = por %p68, %p69
      %p72 = scmp.ne.s32.totalorder %s57, %s71
      %p73 = scmp.eq.s32.totalorder %s19, 0
      %p74 = por %p72, %p73
      %s75 = ssub.s32 %s20, %s32
      %s76 = ssub.s32 %s21, %s28
      %s77 = sor.u32 %s75, %s76
      %p78 = scmp.eq.s32.totalorder %s77, 0
      %s80 = sadd.s32 %s79, 1
      %s81 = scalar_select %p78, %s79, %s80
      %p84 = pneg %p78
      %p85 = scmp.eq.s32.totalorder %s13, 3
      %p86 = por %p84, %p85
      %p87 = scmp.ne.s32.totalorder %s79, %s82
      %p88 = scmp.eq.s32.totalorder %s13, 0
      %p89 = por %p87, %p88
      %p90 = scmp.ne.s32.totalorder %s79, %s82
      %p91 = scmp.eq.s32.totalorder %s18, 3
      %p92 = por %p90, %p91
      %p93 = scmp.ne.s32.totalorder %s82, %s83
      %p94 = scmp.eq.s32.totalorder %s18, 0
      %p95 = por %p93, %p94
      %p96 = scmp.ne.s32.totalorder %s82, %s83
      %p97 = scmp.eq.s32.totalorder %s19, 3
      %p98 = por %p96, %p97
      %p100 = scmp.ne.s32.totalorder %s83, %s99
      %p101 = scmp.eq.s32.totalorder %s19, 0
      %p102 = por %p100, %p101
      %p103 = scmp.le.s32.totalorder 1, %s13
      %p104 = scmp.lt.s32.totalorder %s13, 5
      %p105 = pnand %p103, %p104
      %p106 = pneg %p105
      // Predicated region
      $region9: #{tpu_custom_call.1} parent=5 // pred_check
        _
      $region10: #{tpu_custom_call.1} parent=5 // pred_check_branch
        %108 = sbr.rel (%p105) target = $region12
      $region11: #{tpu_custom_call.1} parent=5 // pred_region
        %s109 = ssub.s32 %s13, 1
        // Predicated region
        $region13: #{tpu_custom_call.1} parent=11 // pred_check
          %p110 = pneg %p46
        $region14: #{tpu_custom_call.1} parent=11 // pred_check_branch
          %112 = sbr.rel (%p110) target = $region16
        $region15: #{tpu_custom_call.1} parent=11 // pred_region
          %s114 = ssub.s32 384, 384
          %115 = vsyncadd [#allocation7], %s114
          %s116 = sshll.u32 [#allocation6], 4
          %s117 = int_to_ptr.vmem [resolvable:$true] %s116
          %122 = dma.hbm_to_vmem [thread:$0]  %s1, 384, %s117, [#allocation7], 128, 128, 8
        $region16: #{tpu_custom_call.1} parent=11 // pred_fallthru
          _
        // Predicated region
        $region17: #{tpu_custom_call.1} parent=11 // pred_check
          %p123 = pneg %p67
        $region18: #{tpu_custom_call.1} parent=11 // pred_check_branch
          %125 = sbr.rel (%p123) target = $region20
        $region19: #{tpu_custom_call.1} parent=11 // pred_region
          _
        $region20: #{tpu_custom_call.1} parent=11 // pred_fallthru
          _
      $region12: #{tpu_custom_call.1} parent=5 // pred_fallthru
        _
      %p126 = scmp.lt.s32.totalorder %s13, 4
      // Predicated region
      $region21: #{tpu_custom_call.1} parent=5 // pred_check
        %p127 = pneg %p126
      $region22: #{tpu_custom_call.1} parent=5 // pred_check_branch
        %129 = sbr.rel (%p127) target = $region24
      $region23: #{tpu_custom_call.1} parent=5 // pred_region
        _
      $region24: #{tpu_custom_call.1} parent=5 // pred_fallthru
        _
      %p130 = scmp.le.s32.totalorder 1, %s13
      %p131 = scmp.lt.s32.totalorder %s13, 5
      %p132 = pnand %p130, %p131
      %p133 = pneg %p132
      // Predicated region
      $region25: #{tpu_custom_call.1} parent=5 // pred_check
        _
      $region26: #{tpu_custom_call.1} parent=5 // pred_check_branch
        %135 = sbr.rel (%p132) target = $region28
      $region27: #{tpu_custom_call.1} parent=5 // pred_region
        %s136 = ssub.s32 %s13, 1
        // Predicated region
        $region29: #{tpu_custom_call.1} parent=27 // pred_check
          %p137 = pneg %p46
        $region30: #{tpu_custom_call.1} parent=27 // pred_check_branch
          %139 = sbr.rel (%p137) target = $region32
        $region31: #{tpu_custom_call.1} parent=27 // pred_region
          %140 = dma.done [#allocation7], 384
        $region32: #{tpu_custom_call.1} parent=27 // pred_fallthru
          _
        %p141 = pneg %p46
        %p142 = pneg %p43
        %p143 = pneg %p67
        %p144 = pneg %p64
        %p145 = pneg %p95
        %p146 = pneg %p92
        %s147 = sand.u32 %s82, 1
        %s148 = scalar_lea.sflag [#allocation8], %s147
        %s149 = sand.u32 %s82, 1
        %s150 = smul.addr %s149, 64
        %s151 = scalar_lea.vmem [#allocation9], %s150
        %s152 = smul.u32 8, %s23
        %p153 = scmp.lt.s32.totalorder %s23, 0
        %s154 = ssub.s32 0, %s23
        %s155 = scalar_select %p153, %s154, %s23
        %s156 = sand.u32 %s155, 1
        %s157 = ssub.s32 0, %s156
        %s158 = scalar_select %p153, %s157, %s156
        %p159 = scmp.ne.s32.totalorder %s158, 0
        %p160 = scmp.lt.s32.totalorder %s158, 0
        %p161 = pnand %p160, %p159
        %p162 = pneg %p161
        %s163 = sadd.s32 %s158, 2
        %s164 = scalar_select %p162, %s163, %s158
        %p165 = scmp.eq.s32.totalorder %s23, 0
        // Predicated region
        $region33: #{tpu_custom_call.1} parent=27 // pred_check
          %p166 = pneg %p165
        $region34: #{tpu_custom_call.1} parent=27 // pred_check_branch
          %168 = sbr.rel (%p166) target = $region36
        $region35: #{tpu_custom_call.1} parent=27 // pred_region
          %s169 = smul.u32 %s22, 19
          %s170 = smul.addr %s169, 128
          %s171 = scalar_lea.hbm %s0, %s170
          // Predicated region
          $region37: #{tpu_custom_call.1} parent=35 // pred_check
            _
          $region38: #{tpu_custom_call.1} parent=35 // pred_check_branch
            %173 = sbr.rel target = $region40
          $region39: #{tpu_custom_call.1} parent=35 // pred_region
            %174 = sst [smem:[#allocation12]] [#allocation11]
            %175 = sst [smem:[#allocation13]] [#allocation10]
          $region40: #{tpu_custom_call.1} parent=35 // pred_fallthru
            _
          %177 = shalt.err (0)
          %s179 = sshll.u32 [#allocation2], 4
          %s180 = int_to_ptr.vmem [resolvable:$true] %s179
          %182 = dma.hbm_to_vmem [thread:$0]  %s171, 1408, %s180, [#allocation3]
        $region36: #{tpu_custom_call.1} parent=27 // pred_fallthru
          _
        %s183 = smul.u32 %s164, 11
        %s184 = smul.addr %s183, 8
        %s185 = scalar_lea.vmem [#allocation2], %s184
        %s186 = scalar_lea.sflag [#allocation3], %s164
        %s187 = smul.u32 8, 1
        %s188 = smul.u32 %s187, 11
        %s189 = sshll.u32 %s188, 4
        %190 = dma.done %s186, %s189
        %s191 = sadd.s32 %s23, 1
        %p192 = scmp.lt.s32.totalorder %s191, 2
        // Predicated region
        $region41: #{tpu_custom_call.1} parent=27 // pred_check
          %p193 = pneg %p192
        $region42: #{tpu_custom_call.1} parent=27 // pred_check_branch
          %195 = sbr.rel (%p193) target = $region44
        $region43: #{tpu_custom_call.1} parent=27 // pred_region
          %s196 = ssub.s32 1, %s164
          %s197 = smul.u32 %s191, 1024
          %s198 = sshra.s32 %s197, 7
          %s199 = sand.u32 %s197, 127
          %s200 = smul.u32 %s22, 19
          %s201 = sadd.s32 %s198, %s200
          %s202 = smul.addr %s201, 128
          %s203 = scalar_lea.hbm %s0, %s202
          %s204 = smul.u32 %s196, 11
          %s205 = smul.addr %s204, 8
          %s206 = scalar_lea.vmem [#allocation2], %s205
          %s207 = scalar_lea.sflag [#allocation3], %s196
          // Predicated region
          $region45: #{tpu_custom_call.1} parent=43 // pred_check
            _
          $region46: #{tpu_custom_call.1} parent=43 // pred_check_branch
            %209 = sbr.rel target = $region48
          $region47: #{tpu_custom_call.1} parent=43 // pred_region
            %210 = sst [smem:[#allocation12]] [#allocation15]
            %211 = sst [smem:[#allocation13]] [#allocation14]
          $region48: #{tpu_custom_call.1} parent=43 // pred_fallthru
            _
          %213 = shalt.err (0)
          %s215 = sshll.u32 %s206, 4
          %s216 = int_to_ptr.vmem [resolvable:$true] %s215
          %218 = dma.hbm_to_vmem [thread:$0]  %s203, 1408, %s216, %s207
        $region44: #{tpu_custom_call.1} parent=27 // pred_fallthru
          _
        %v219 = vld [vmem:[%s185] sm:$0xff]
        %v220 = vld [vmem:[%s185 + $0x8] sm:$0xff]
        %v221 = vld [vmem:[%s185 + $0x10] sm:$0xff]
        %v222 = vld [vmem:[%s185 + $0x18] sm:$0xff]
        %v223 = vld [vmem:[%s185 + $0x20] sm:$0xff]
        %v224 = vld [vmem:[%s185 + $0x28] sm:$0xff]
        %v225 = vld [vmem:[%s185 + $0x30] sm:$0xff]
        %v226 = vld [vmem:[%s185 + $0x38] sm:$0xff]
        %v227 = vld [vmem:[%s185 + $0x40] sm:$0xff]
        %v228 = vld [vmem:[%s185 + $0x48] sm:$0xff]
        %229 = vst [vmem:[#allocation4] sm:$0xff] %v219
        %230 = vst [vmem:[#allocation4 + $0x8] sm:$0xff] %v220
        %231 = vst [vmem:[#allocation4 + $0x10] sm:$0xff] %v221
        %232 = vst [vmem:[#allocation4 + $0x18] sm:$0xff] %v222
        %233 = vst [vmem:[#allocation4 + $0x20] sm:$0xff] %v223
        %234 = vst [vmem:[#allocation4 + $0x28] sm:$0xff] %v224
        %235 = vst [vmem:[#allocation4 + $0x30] sm:$0xff] %v225
        %236 = vst [vmem:[#allocation4 + $0x38] sm:$0xff] %v226
        %237 = vst [vmem:[#allocation4 + $0x40] sm:$0xff] %v227
        %238 = vst [vmem:[#allocation4 + $0x48] sm:$0xff] %v228
        %v239 = vld [vmem:[%s185] sm:$0xff]
        %v240 = vld [vmem:[%s185 + $0x8] sm:$0xff]
        %v241 = vld [vmem:[%s185 + $0x10] sm:$0xff]
        %v242 = vld [vmem:[%s185 + $0x18] sm:$0xff]
        %v243 = vld [vmem:[%s185 + $0x20] sm:$0xff]
        %v244 = vld [vmem:[%s185 + $0x28] sm:$0xff]
        %v245 = vld [vmem:[%s185 + $0x30] sm:$0xff]
        %v246 = vld [vmem:[%s185 + $0x38] sm:$0xff]
        %v247 = vld [vmem:[%s185 + $0x40] sm:$0xff]
        %v248 = vld [vmem:[%s185 + $0x48] sm:$0xff]
        %v249 = vld [vmem:[%s185 + $0x50] sm:$0xff]
        %261 = vrot.lane.b32.xlu0 %v239, 127
        %v262 = vpop.permute.xlu0 %261
        %263 = vrot.lane.b32.xlu0 %v240, 127
        %v264 = vpop.permute.xlu0 %263
        %265 = vrot.lane.b32.xlu0 %v241, 127
        %v266 = vpop.permute.xlu0 %265
        %267 = vrot.lane.b32.xlu0 %v242, 127
        %v268 = vpop.permute.xlu0 %267
        %269 = vrot.lane.b32.xlu0 %v243, 127
        %v270 = vpop.permute.xlu0 %269
        %271 = vrot.lane.b32.xlu0 %v244, 127
        %v272 = vpop.permute.xlu0 %271
        %273 = vrot.lane.b32.xlu0 %v245, 127
        %v274 = vpop.permute.xlu0 %273
        %275 = vrot.lane.b32.xlu0 %v246, 127
        %v276 = vpop.permute.xlu0 %275
        %277 = vrot.lane.b32.xlu0 %v247, 127
        %v278 = vpop.permute.xlu0 %277
        %279 = vrot.lane.b32.xlu0 %v248, 127
        %v280 = vpop.permute.xlu0 %279
        %281 = vrot.lane.b32.xlu0 %v249, 127
        %v282 = vpop.permute.xlu0 %281
        %vm283 = vcmask 1039360
        %v284 = vsel %vm283, %v262, %v264
        %v285 = vsel %vm283, %v264, %v266
        %v286 = vsel %vm283, %v266, %v268
        %v287 = vsel %vm283, %v268, %v270
        %v288 = vsel %vm283, %v270, %v272
        %v289 = vsel %vm283, %v272, %v274
        %v290 = vsel %vm283, %v274, %v276
        %v291 = vsel %vm283, %v276, %v278
        %v292 = vsel %vm283, %v278, %v280
        %v293 = vsel %vm283, %v280, %v282
        %304 = vst [vmem:[#allocation4 + $0x50] sm:$0xff] %v284
        %305 = vst [vmem:[#allocation4 + $0x58] sm:$0xff] %v285
        %306 = vst [vmem:[#allocation4 + $0x60] sm:$0xff] %v286
        %307 = vst [vmem:[#allocation4 + $0x68] sm:$0xff] %v287
        %308 = vst [vmem:[#allocation4 + $0x70] sm:$0xff] %v288
        %309 = vst [vmem:[#allocation4 + $0x78] sm:$0xff] %v289
        %310 = vst [vmem:[#allocation4 + $0x80] sm:$0xff] %v290
        %311 = vst [vmem:[#allocation4 + $0x88] sm:$0xff] %v291
        %312 = vst [vmem:[#allocation4 + $0x90] sm:$0xff] %v292
        %313 = vst [vmem:[#allocation4 + $0x98] sm:$0xff] %v293
        %v314 = vld [vmem:[%s185] sm:$0xff]
        %v315 = vld [vmem:[%s185 + $0x8] sm:$0xff]
        %v316 = vld [vmem:[%s185 + $0x10] sm:$0xff]
        %v317 = vld [vmem:[%s185 + $0x18] sm:$0xff]
        %v318 = vld [vmem:[%s185 + $0x20] sm:$0xff]
        %v319 = vld [vmem:[%s185 + $0x28] sm:$0xff]
        %v320 = vld [vmem:[%s185 + $0x30] sm:$0xff]
        %v321 = vld [vmem:[%s185 + $0x38] sm:$0xff]
        %v322 = vld [vmem:[%s185 + $0x40] sm:$0xff]
        %v323 = vld [vmem:[%s185 + $0x48] sm:$0xff]
        %v324 = vld [vmem:[%s185 + $0x50] sm:$0xff]
        %336 = vrot.lane.b32.xlu0 %v314, 126
        %v337 = vpop.permute.xlu0 %336
        %338 = vrot.lane.b32.xlu0 %v315, 126
        %v339 = vpop.permute.xlu0 %338
        %340 = vrot.lane.b32.xlu0 %v316, 126
        %v341 = vpop.permute.xlu0 %340
        %342 = vrot.lane.b32.xlu0 %v317, 126
        %v343 = vpop.permute.xlu0 %342
        %344 = vrot.lane.b32.xlu0 %v318, 126
        %v345 = vpop.permute.xlu0 %344
        %346 = vrot.lane.b32.xlu0 %v319, 126
        %v347 = vpop.permute.xlu0 %346
        %348 = vrot.lane.b32.xlu0 %v320, 126
        %v349 = vpop.permute.xlu0 %348
        %350 = vrot.lane.b32.xlu0 %v321, 126
        %v351 = vpop.permute.xlu0 %350
        %352 = vrot.lane.b32.xlu0 %v322, 126
        %v353 = vpop.permute.xlu0 %352
        %354 = vrot.lane.b32.xlu0 %v323, 126
        %v355 = vpop.permute.xlu0 %354
        %356 = vrot.lane.b32.xlu0 %v324, 126
        %v357 = vpop.permute.xlu0 %356
        %vm358 = vcmask 1031168
        %v359 = vsel %vm358, %v337, %v339
        %v360 = vsel %vm358, %v339, %v341
        %v361 = vsel %vm358, %v341, %v343
        %v362 = vsel %vm358, %v343, %v345
        %v363 = vsel %vm358, %v345, %v347
        %v364 = vsel %vm358, %v347, %v349
        %v365 = vsel %vm358, %v349, %v351
        %v366 = vsel %vm358, %v351, %v353
        %v367 = vsel %vm358, %v353, %v355
        %v368 = vsel %vm358, %v355, %v357
        %379 = vst [vmem:[#allocation4 + $0xa0] sm:$0xff] %v359
        %380 = vst [vmem:[#allocation4 + $0xa8] sm:$0xff] %v360
        %381 = vst [vmem:[#allocation4 + $0xb0] sm:$0xff] %v361
        %382 = vst [vmem:[#allocation4 + $0xb8] sm:$0xff] %v362
        %383 = vst [vmem:[#allocation4 + $0xc0] sm:$0xff] %v363
        %384 = vst [vmem:[#allocation4 + $0xc8] sm:$0xff] %v364
        %385 = vst [vmem:[#allocation4 + $0xd0] sm:$0xff] %v365
        %386 = vst [vmem:[#allocation4 + $0xd8] sm:$0xff] %v366
        %387 = vst [vmem:[#allocation4 + $0xe0] sm:$0xff] %v367
        %388 = vst [vmem:[#allocation4 + $0xe8] sm:$0xff] %v368
        %v389 = vld [vmem:[#allocation6] sm:$0xff]
        %v390 = vld [vmem:[#allocation4] sm:$0xff]
        %v391 = vld [vmem:[#allocation4 + $0x8] sm:$0xff]
        %v392 = vld [vmem:[#allocation4 + $0x10] sm:$0xff]
        %v393 = vld [vmem:[#allocation4 + $0x18] sm:$0xff]
        %v394 = vld [vmem:[#allocation4 + $0x20] sm:$0xff]
        %v395 = vld [vmem:[#allocation4 + $0x28] sm:$0xff]
        %v396 = vld [vmem:[#allocation4 + $0x30] sm:$0xff]
        %v397 = vld [vmem:[#allocation4 + $0x38] sm:$0xff]
        %v398 = vld [vmem:[#allocation4 + $0x50] sm:$0xff]
        %v399 = vld [vmem:[#allocation4 + $0x58] sm:$0xff]
        %v400 = vld [vmem:[#allocation4 + $0x60] sm:$0xff]
        %v401 = vld [vmem:[#allocation4 + $0x68] sm:$0xff]
        %v402 = vld [vmem:[#allocation4 + $0x70] sm:$0xff]
        %v403 = vld [vmem:[#allocation4 + $0x78] sm:$0xff]
        %v404 = vld [vmem:[#allocation4 + $0x80] sm:$0xff]
        %v405 = vld [vmem:[#allocation4 + $0x88] sm:$0xff]
        %v406 = vld [vmem:[#allocation4 + $0xa0] sm:$0xff]
        %v407 = vld [vmem:[#allocation4 + $0xa8] sm:$0xff]
        %v408 = vld [vmem:[#allocation4 + $0xb0] sm:$0xff]
        %v409 = vld [vmem:[#allocation4 + $0xb8] sm:$0xff]
        %v410 = vld [vmem:[#allocation4 + $0xc0] sm:$0xff]
        %v411 = vld [vmem:[#allocation4 + $0xc8] sm:$0xff]
        %v412 = vld [vmem:[#allocation4 + $0xd0] sm:$0xff]
        %v413 = vld [vmem:[#allocation4 + $0xd8] sm:$0xff]
        %vm414 = vcmask 195584
        %v416 = vsel %vm414, %v389, 0
        %418 = vmatprep.subr.mxu0 %v391
        %419 = vmatpush1.msra.mxu0 %v390
        %420 = vmatprep.subr.mxu0 %v399
        %421 = vmatpush1.msra.mxu0 %v398
        %422 = vmatprep.subr.mxu0 %v407
        %423 = vmatpush1.msra.mxu0 %v406
        %424 = vmatprep.subr.mxu0 0.0
        %425 = vmatpush1.msra.mxu0 0.0
        %426 = vmatprep.subr.mxu0 0.0
        %427 = vmatpush1.msra.mxu0 0.0
        %428 = vmatprep.subr.mxu0 0.0
        %429 = vmatpush1.msra.mxu0 0.0
        %430 = vmatprep.subr.mxu0 0.0
        %431 = vmatpush1.msra.mxu0 0.0
        %432 = vmatprep.subr.mxu0 0.0
        %433 = vmatpush1.msra.mxu0 0.0
        %434 = vmatprep.subr.mxu0 0.0
        %435 = vmatpush1.msra.mxu0 0.0
        %436 = vmatprep.subr.mxu0 0.0
        %437 = vmatpush1.msra.mxu0 0.0
        %438 = vmatprep.subr.mxu0 0.0
        %439 = vmatpush1.msra.mxu0 0.0
        %440 = vmatprep.subr.mxu0 0.0
        %441 = vmatpush1.msra.mxu0 0.0
        %442 = vmatprep.subr.mxu0 0.0
        %443 = vmatpush1.msra.mxu0 0.0
        %444 = vmatprep.subr.mxu0 0.0
        %445 = vmatpush1.msra.mxu0 0.0
        %446 = vmatprep.subr.mxu0 0.0
        %447 = vmatpush1.msra.mxu0 0.0
        %448 = vmatprep.subr.mxu0 0.0
        %449 = vmatpush1.msra.mxu0 0.0
        %450 = vmatprep.subr.mxu0 0.0
        %451 = vmatpush1.msra.mxu0 0.0
        %452 = vmatprep.subr.mxu0 0.0
        %453 = vmatpush1.msra.mxu0 0.0
        %454 = vmatprep.subr.mxu0 0.0
        %455 = vmatpush1.msra.mxu0 0.0
        %456 = vmatprep.subr.mxu0 0.0
        %457 = vmatpush1.msra.mxu0 0.0
        %458 = vmatprep.subr.mxu0 0.0
        %459 = vmatpush1.msra.mxu0 0.0
        %460 = vmatprep.subr.mxu0 0.0
        %461 = vmatpush1.msra.mxu0 0.0
        %462 = vmatprep.subr.mxu0 0.0
        %463 = vmatpush1.msra.mxu0 0.0
        %464 = vmatprep.subr.mxu0 0.0
        %465 = vmatpush1.msra.mxu0 0.0
        %466 = vmatprep.subr.mxu0 0.0
        %467 = vmatpush1.msra.mxu0 0.0
        %468 = vmatprep.subr.mxu0 0.0
        %469 = vmatpush1.msra.mxu0 0.0
        %470 = vmatprep.subr.mxu0 0.0
        %471 = vmatpush1.msra.mxu0 0.0
        %472 = vmatprep.subr.mxu0 0.0
        %473 = vmatpush1.msra.mxu0 0.0
        %474 = vmatprep.subr.mxu0 0.0
        %475 = vmatpush1.msra.mxu0 0.0
        %476 = vmatprep.subr.mxu0 0.0
        %477 = vmatpush1.msra.mxu0 0.0
        %478 = vmatprep.subr.mxu0 0.0
        %479 = vmatpush1.msra.mxu0 0.0
        %480 = vmatprep.subr.mxu0 0.0
        %481 = vmatpush1.msra.mxu0 0.0
        %482 = vmatprep.mubr.f32.mxu0 0.0
        %483 = vmatmul.mubr.f32.gmra.mrb[0].mxu0 %v416
        %v484 = vpop.f32.mrb[0].mxu0
        %v485 = vadd.f32 0.0, %v484
        %v486 = vpop.f32.mrb[0].mxu0
        %v487 = vadd.f32 0.0, %v486
        %488 = vdwg.mxu0
        %489 = vmatprep.subr.mxu0 %v393
        %490 = vmatpush1.msra.mxu0 %v392
        %491 = vmatprep.subr.mxu0 %v401
        %492 = vmatpush1.msra.mxu0 %v400
        %493 = vmatprep.subr.mxu0 %v409
        %494 = vmatpush1.msra.mxu0 %v408
        %495 = vmatprep.subr.mxu0 0.0
        %496 = vmatpush1.msra.mxu0 0.0
        %497 = vmatprep.subr.mxu0 0.0
        %498 = vmatpush1.msra.mxu0 0.0
        %499 = vmatprep.subr.mxu0 0.0
        %500 = vmatpush1.msra.mxu0 0.0
        %501 = vmatprep.subr.mxu0 0.0
        %502 = vmatpush1.msra.mxu0 0.0
        %503 = vmatprep.subr.mxu0 0.0
        %504 = vmatpush1.msra.mxu0 0.0
        %505 = vmatprep.subr.mxu0 0.0
        %506 = vmatpush1.msra.mxu0 0.0
        %507 = vmatprep.subr.mxu0 0.0
        %508 = vmatpush1.msra.mxu0 0.0
        %509 = vmatprep.subr.mxu0 0.0
        %510 = vmatpush1.msra.mxu0 0.0
        %511 = vmatprep.subr.mxu0 0.0
        %512 = vmatpush1.msra.mxu0 0.0
        %513 = vmatprep.subr.mxu0 0.0
        %514 = vmatpush1.msra.mxu0 0.0
        %515 = vmatprep.subr.mxu0 0.0
        %516 = vmatpush1.msra.mxu0 0.0
        %517 = vmatprep.subr.mxu0 0.0
        %518 = vmatpush1.msra.mxu0 0.0
        %519 = vmatprep.subr.mxu0 0.0
        %520 = vmatpush1.msra.mxu0 0.0
        %521 = vmatprep.subr.mxu0 0.0
        %522 = vmatpush1.msra.mxu0 0.0
        %523 = vmatprep.subr.mxu0 0.0
        %524 = vmatpush1.msra.mxu0 0.0
        %525 = vmatprep.subr.mxu0 0.0
        %526 = vmatpush1.msra.mxu0 0.0
        %527 = vmatprep.subr.mxu0 0.0
        %528 = vmatpush1.msra.mxu0 0.0
        %529 = vmatprep.subr.mxu0 0.0
        %530 = vmatpush1.msra.mxu0 0.0
        %531 = vmatprep.subr.mxu0 0.0
        %532 = vmatpush1.msra.mxu0 0.0
        %533 = vmatprep.subr.mxu0 0.0
        %534 = vmatpush1.msra.mxu0 0.0
        %535 = vmatprep.subr.mxu0 0.0
        %536 = vmatpush1.msra.mxu0 0.0
        %537 = vmatprep.subr.mxu0 0.0
        %538 = vmatpush1.msra.mxu0 0.0
        %539 = vmatprep.subr.mxu0 0.0
        %540 = vmatpush1.msra.mxu0 0.0
        %541 = vmatprep.subr.mxu0 0.0
        %542 = vmatpush1.msra.mxu0 0.0
        %543 = vmatprep.subr.mxu0 0.0
        %544 = vmatpush1.msra.mxu0 0.0
        %545 = vmatprep.subr.mxu0 0.0
        %546 = vmatpush1.msra.mxu0 0.0
        %547 = vmatprep.subr.mxu0 0.0
        %548 = vmatpush1.msra.mxu0 0.0
        %549 = vmatprep.subr.mxu0 0.0
        %550 = vmatpush1.msra.mxu0 0.0
        %551 = vmatprep.subr.mxu0 0.0
        %552 = vmatpush1.msra.mxu0 0.0
        %553 = vmatprep.mubr.f32.mxu0 0.0
        %554 = vmatmul.mubr.f32.gmra.mrb[0].mxu0 %v416
        %v555 = vpop.f32.mrb[0].mxu0
        %v556 = vadd.f32 0.0, %v555
        %v557 = vpop.f32.mrb[0].mxu0
        %v558 = vadd.f32 0.0, %v557
        %559 = vdwg.mxu0
        %560 = vmatprep.subr.mxu0 %v395
        %561 = vmatpush1.msra.mxu0 %v394
        %562 = vmatprep.subr.mxu0 %v403
        %563 = vmatpush1.msra.mxu0 %v402
        %564 = vmatprep.subr.mxu0 %v411
        %565 = vmatpush1.msra.mxu0 %v410
        %566 = vmatprep.subr.mxu0 0.0
        %567 = vmatpush1.msra.mxu0 0.0
        %568 = vmatprep.subr.mxu0 0.0
        %569 = vmatpush1.msra.mxu0 0.0
        %570 = vmatprep.subr.mxu0 0.0
        %571 = vmatpush1.msra.mxu0 0.0
        %572 = vmatprep.subr.mxu0 0.0
        %573 = vmatpush1.msra.mxu0 0.0
        %574 = vmatprep.subr.mxu0 0.0
        %575 = vmatpush1.msra.mxu0 0.0
        %576 = vmatprep.subr.mxu0 0.0
        %577 = vmatpush1.msra.mxu0 0.0
        %578 = vmatprep.subr.mxu0 0.0
        %579 = vmatpush1.msra.mxu0 0.0
        %580 = vmatprep.subr.mxu0 0.0
        %581 = vmatpush1.msra.mxu0 0.0
        %582 = vmatprep.subr.mxu0 0.0
        %583 = vmatpush1.msra.mxu0 0.0
        %584 = vmatprep.subr.mxu0 0.0
        %585 = vmatpush1.msra.mxu0 0.0
        %586 = vmatprep.subr.mxu0 0.0
        %587 = vmatpush1.msra.mxu0 0.0
        %588 = vmatprep.subr.mxu0 0.0
        %589 = vmatpush1.msra.mxu0 0.0
        %590 = vmatprep.subr.mxu0 0.0
        %591 = vmatpush1.msra.mxu0 0.0
        %592 = vmatprep.subr.mxu0 0.0
        %593 = vmatpush1.msra.mxu0 0.0
        %594 = vmatprep.subr.mxu0 0.0
        %595 = vmatpush1.msra.mxu0 0.0
        %596 = vmatprep.subr.mxu0 0.0
        %597 = vmatpush1.msra.mxu0 0.0
        %598 = vmatprep.subr.mxu0 0.0
        %599 = vmatpush1.msra.mxu0 0.0
        %600 = vmatprep.subr.mxu0 0.0
        %601 = vmatpush1.msra.mxu0 0.0
        %602 = vmatprep.subr.mxu0 0.0
        %603 = vmatpush1.msra.mxu0 0.0
        %604 = vmatprep.subr.mxu0 0.0
        %605 = vmatpush1.msra.mxu0 0.0
        %606 = vmatprep.subr.mxu0 0.0
        %607 = vmatpush1.msra.mxu0 0.0
        %608 = vmatprep.subr.mxu0 0.0
        %609 = vmatpush1.msra.mxu0 0.0
        %610 = vmatprep.subr.mxu0 0.0
        %611 = vmatpush1.msra.mxu0 0.0
        %612 = vmatprep.subr.mxu0 0.0
        %613 = vmatpush1.msra.mxu0 0.0
        %614 = vmatprep.subr.mxu0 0.0
        %615 = vmatpush1.msra.mxu0 0.0
        %616 = vmatprep.subr.mxu0 0.0
        %617 = vmatpush1.msra.mxu0 0.0
        %618 = vmatprep.subr.mxu0 0.0
        %619 = vmatpush1.msra.mxu0 0.0
        %620 = vmatprep.subr.mxu0 0.0
        %621 = vmatpush1.msra.mxu0 0.0
        %622 = vmatprep.subr.mxu0 0.0
        %623 = vmatpush1.msra.mxu0 0.0
        %624 = vmatprep.mubr.f32.mxu0 0.0
        %625 = vmatmul.mubr.f32.gmra.mrb[0].mxu0 %v416
        %v626 = vpop.f32.mrb[0].mxu0
        %v627 = vadd.f32 0.0, %v626
        %v628 = vpop.f32.mrb[0].mxu0
        %v629 = vadd.f32 0.0, %v628
        %630 = vdwg.mxu0
        %631 = vmatprep.subr.mxu0 %v397
        %632 = vmatpush1.msra.mxu0 %v396
        %633 = vmatprep.subr.mxu0 %v405
        %634 = vmatpush1.msra.mxu0 %v404
        %635 = vmatprep.subr.mxu0 %v413
        %636 = vmatpush1.msra.mxu0 %v412
        %637 = vmatprep.subr.mxu0 0.0
        %638 = vmatpush1.msra.mxu0 0.0
        %639 = vmatprep.subr.mxu0 0.0
        %640 = vmatpush1.msra.mxu0 0.0
        %641 = vmatprep.subr.mxu0 0.0
        %642 = vmatpush1.msra.mxu0 0.0
        %643 = vmatprep.subr.mxu0 0.0
        %644 = vmatpush1.msra.mxu0 0.0
        %645 = vmatprep.subr.mxu0 0.0
        %646 = vmatpush1.msra.mxu0 0.0
        %647 = vmatprep.subr.mxu0 0.0
        %648 = vmatpush1.msra.mxu0 0.0
        %649 = vmatprep.subr.mxu0 0.0
        %650 = vmatpush1.msra.mxu0 0.0
        %651 = vmatprep.subr.mxu0 0.0
        %652 = vmatpush1.msra.mxu0 0.0
        %653 = vmatprep.subr.mxu0 0.0
        %654 = vmatpush1.msra.mxu0 0.0
        %655 = vmatprep.subr.mxu0 0.0
        %656 = vmatpush1.msra.mxu0 0.0
        %657 = vmatprep.subr.mxu0 0.0
        %658 = vmatpush1.msra.mxu0 0.0
        %659 = vmatprep.subr.mxu0 0.0
        %660 = vmatpush1.msra.mxu0 0.0
        %661 = vmatprep.subr.mxu0 0.0
        %662 = vmatpush1.msra.mxu0 0.0
        %663 = vmatprep.subr.mxu0 0.0
        %664 = vmatpush1.msra.mxu0 0.0
        %665 = vmatprep.subr.mxu0 0.0
        %666 = vmatpush1.msra.mxu0 0.0
        %667 = vmatprep.subr.mxu0 0.0
        %668 = vmatpush1.msra.mxu0 0.0
        %669 = vmatprep.subr.mxu0 0.0
        %670 = vmatpush1.msra.mxu0 0.0
        %671 = vmatprep.subr.mxu0 0.0
        %672 = vmatpush1.msra.mxu0 0.0
        %673 = vmatprep.subr.mxu0 0.0
        %674 = vmatpush1.msra.mxu0 0.0
        %675 = vmatprep.subr.mxu0 0.0
        %676 = vmatpush1.msra.mxu0 0.0
        %677 = vmatprep.subr.mxu0 0.0
        %678 = vmatpush1.msra.mxu0 0.0
        %679 = vmatprep.subr.mxu0 0.0
        %680 = vmatpush1.msra.mxu0 0.0
        %681 = vmatprep.subr.mxu0 0.0
        %682 = vmatpush1.msra.mxu0 0.0
        %683 = vmatprep.subr.mxu0 0.0
        %684 = vmatpush1.msra.mxu0 0.0
        %685 = vmatprep.subr.mxu0 0.0
        %686 = vmatpush1.msra.mxu0 0.0
        %687 = vmatprep.subr.mxu0 0.0
        %688 = vmatpush1.msra.mxu0 0.0
        %689 = vmatprep.subr.mxu0 0.0
        %690 = vmatpush1.msra.mxu0 0.0
        %691 = vmatprep.subr.mxu0 0.0
        %692 = vmatpush1.msra.mxu0 0.0
        %693 = vmatprep.subr.mxu0 0.0
        %694 = vmatpush1.msra.mxu0 0.0
        %695 = vmatprep.mubr.f32.mxu0 0.0
        %696 = vmatmul.mubr.f32.gmra.mrb[0].mxu0 %v416
        %v697 = vpop.f32.mrb[0].mxu0
        %v698 = vadd.f32 0.0, %v697
        %v699 = vpop.f32.mrb[0].mxu0
        %v700 = vadd.f32 0.0, %v699
        %701 = vdwg.mxu0
        %702 = vst [vmem:[#allocation5] sm:$0xff] %v485
        %703 = vst [vmem:[#allocation5 + $0x8] sm:$0xff] %v487
        %704 = vst [vmem:[#allocation5 + $0x10] sm:$0xff] %v556
        %705 = vst [vmem:[#allocation5 + $0x18] sm:$0xff] %v558
        %706 = vst [vmem:[#allocation5 + $0x20] sm:$0xff] %v627
        %707 = vst [vmem:[#allocation5 + $0x28] sm:$0xff] %v629
        %708 = vst [vmem:[#allocation5 + $0x30] sm:$0xff] %v698
        %709 = vst [vmem:[#allocation5 + $0x38] sm:$0xff] %v700
        %s710 = scalar_lea.vmem [#allocation6], 8
        %v711 = vld [vmem:[%s710] sm:$0xff]
        %v712 = vld [vmem:[#allocation4 + $0x8] sm:$0xff]
        %v713 = vld [vmem:[#allocation4 + $0x10] sm:$0xff]
        %v714 = vld [vmem:[#allocation4 + $0x18] sm:$0xff]
        %v715 = vld [vmem:[#allocation4 + $0x20] sm:$0xff]
        %v716 = vld [vmem:[#allocation4 + $0x28] sm:$0xff]
        %v717 = vld [vmem:[#allocation4 + $0x30] sm:$0xff]
        %v718 = vld [vmem:[#allocation4 + $0x38] sm:$0xff]
        %v719 = vld [vmem:[#allocation4 + $0x40] sm:$0xff]
        %v720 = vld [vmem:[#allocation4 + $0x58] sm:$0xff]
        %v721 = vld [vmem:[#allocation4 + $0x60] sm:$0xff]
        %v722 = vld [vmem:[#allocation4 + $0x68] sm:$0xff]
        %v723 = vld [vmem:[#allocation4 + $0x70] sm:$0xff]
        %v724 = vld [vmem:[#allocation4 + $0x78] sm:$0xff]
        %v725 = vld [vmem:[#allocation4 + $0x80] sm:$0xff]
        %v726 = vld [vmem:[#allocation4 + $0x88] sm:$0xff]
        %v727 = vld [vmem:[#allocation4 + $0x90] sm:$0xff]
        %v728 = vld [vmem:[#allocation4 + $0xa8] sm:$0xff]
        %v729 = vld [vmem:[#allocation4 + $0xb0] sm:$0xff]
        %v730 = vld [vmem:[#allocation4 + $0xb8] sm:$0xff]
        %v731 = vld [vmem:[#allocation4 + $0xc0] sm:$0xff]
        %v732 = vld [vmem:[#allocation4 + $0xc8] sm:$0xff]
        %v733 = vld [vmem:[#allocation4 + $0xd0] sm:$0xff]
        %v734 = vld [vmem:[#allocation4 + $0xd8] sm:$0xff]
        %v735 = vld [vmem:[#allocation4 + $0xe0] sm:$0xff]
        %v737 = vsel %vm414, %v711, 0
        %739 = vmatprep.subr.mxu0 %v713
        %740 = vmatpush1.msra.mxu0 %v712
        %741 = vmatprep.subr.mxu0 %v721
        %742 = vmatpush1.msra.mxu0 %v720
        %743 = vmatprep.subr.mxu0 %v729
        %744 = vmatpush1.msra.mxu0 %v728
        %745 = vmatprep.subr.mxu0 0.0
        %746 = vmatpush1.msra.mxu0 0.0
        %747 = vmatprep.subr.mxu0 0.0
        %748 = vmatpush1.msra.mxu0 0.0
        %749 = vmatprep.subr.mxu0 0.0
        %750 = vmatpush1.msra.mxu0 0.0
        %751 = vmatprep.subr.mxu0 0.0
        %752 = vmatpush1.msra.mxu0 0.0
        %753 = vmatprep.subr.mxu0 0.0
        %754 = vmatpush1.msra.mxu0 0.0
        %755 = vmatprep.subr.mxu0 0.0
        %756 = vmatpush1.msra.mxu0 0.0
        %757 = vmatprep.subr.mxu0 0.0
        %758 = vmatpush1.msra.mxu0 0.0
        %759 = vmatprep.subr.mxu0 0.0
        %760 = vmatpush1.msra.mxu0 0.0
        %761 = vmatprep.subr.mxu0 0.0
        %762 = vmatpush1.msra.mxu0 0.0
        %763 = vmatprep.subr.mxu0 0.0
        %764 = vmatpush1.msra.mxu0 0.0
        %765 = vmatprep.subr.mxu0 0.0
        %766 = vmatpush1.msra.mxu0 0.0
        %767 = vmatprep.subr.mxu0 0.0
        %768 = vmatpush1.msra.mxu0 0.0
        %769 = vmatprep.subr.mxu0 0.0
        %770 = vmatpush1.msra.mxu0 0.0
        %771 = vmatprep.subr.mxu0 0.0
        %772 = vmatpush1.msra.mxu0 0.0
        %773 = vmatprep.subr.mxu0 0.0
        %774 = vmatpush1.msra.mxu0 0.0
        %775 = vmatprep.subr.mxu0 0.0
        %776 = vmatpush1.msra.mxu0 0.0
        %777 = vmatprep.subr.mxu0 0.0
        %778 = vmatpush1.msra.mxu0 0.0
        %779 = vmatprep.subr.mxu0 0.0
        %780 = vmatpush1.msra.mxu0 0.0
        %781 = vmatprep.subr.mxu0 0.0
        %782 = vmatpush1.msra.mxu0 0.0
        %783 = vmatprep.subr.mxu0 0.0
        %784 = vmatpush1.msra.mxu0 0.0
        %785 = vmatprep.subr.mxu0 0.0
        %786 = vmatpush1.msra.mxu0 0.0
        %787 = vmatprep.subr.mxu0 0.0
        %788 = vmatpush1.msra.mxu0 0.0
        %789 = vmatprep.subr.mxu0 0.0
        %790 = vmatpush1.msra.mxu0 0.0
        %791 = vmatprep.subr.mxu0 0.0
        %792 = vmatpush1.msra.mxu0 0.0
        %793 = vmatprep.subr.mxu0 0.0
        %794 = vmatpush1.msra.mxu0 0.0
        %795 = vmatprep.subr.mxu0 0.0
        %796 = vmatpush1.msra.mxu0 0.0
        %797 = vmatprep.subr.mxu0 0.0
        %798 = vmatpush1.msra.mxu0 0.0
        %799 = vmatprep.subr.mxu0 0.0
        %800 = vmatpush1.msra.mxu0 0.0
        %801 = vmatprep.subr.mxu0 0.0
        %802 = vmatpush1.msra.mxu0 0.0
        %803 = vmatprep.mubr.f32.mxu0 0.0
        %804 = vmatmul.mubr.f32.gmra.mrb[0].mxu0 %v737
        %v805 = vpop.f32.mrb[0].mxu0
        %v806 = vadd.f32 0.0, %v805
        %v807 = vpop.f32.mrb[0].mxu0
        %v808 = vadd.f32 0.0, %v807
        %809 = vdwg.mxu0
        %810 = vmatprep.subr.mxu0 %v715
        %811 = vmatpush1.msra.mxu0 %v714
        %812 = vmatprep.subr.mxu0 %v723
        %813 = vmatpush1.msra.mxu0 %v722
        %814 = vmatprep.subr.mxu0 %v731
        %815 = vmatpush1.msra.mxu0 %v730
        %816 = vmatprep.subr.mxu0 0.0
        %817 = vmatpush1.msra.mxu0 0.0
        %818 = vmatprep.subr.mxu0 0.0
        %819 = vmatpush1.msra.mxu0 0.0
        %820 = vmatprep.subr.mxu0 0.0
        %821 = vmatpush1.msra.mxu0 0.0
        %822 = vmatprep.subr.mxu0 0.0
        %823 = vmatpush1.msra.mxu0 0.0
        %824 = vmatprep.subr.mxu0 0.0
        %825 = vmatpush1.msra.mxu0 0.0
        %826 = vmatprep.subr.mxu0 0.0
        %827 = vmatpush1.msra.mxu0 0.0
        %828 = vmatprep.subr.mxu0 0.0
        %829 = vmatpush1.msra.mxu0 0.0
        %830 = vmatprep.subr.mxu0 0.0
        %831 = vmatpush1.msra.mxu0 0.0
        %832 = vmatprep.subr.mxu0 0.0
        %833 = vmatpush1.msra.mxu0 0.0
        %834 = vmatprep.subr.mxu0 0.0
        %835 = vmatpush1.msra.mxu0 0.0
        %836 = vmatprep.subr.mxu0 0.0
        %837 = vmatpush1.msra.mxu0 0.0
        %838 = vmatprep.subr.mxu0 0.0
        %839 = vmatpush1.msra.mxu0 0.0
        %840 = vmatprep.subr.mxu0 0.0
        %841 = vmatpush1.msra.mxu0 0.0
        %842 = vmatprep.subr.mxu0 0.0
        %843 = vmatpush1.msra.mxu0 0.0
        %844 = vmatprep.subr.mxu0 0.0
        %845 = vmatpush1.msra.mxu0 0.0
        %846 = vmatprep.subr.mxu0 0.0
        %847 = vmatpush1.msra.mxu0 0.0
        %848 = vmatprep.subr.mxu0 0.0
        %849 = vmatpush1.msra.mxu0 0.0
        %850 = vmatprep.subr.mxu0 0.0
        %851 = vmatpush1.msra.mxu0 0.0
        %852 = vmatprep.subr.mxu0 0.0
        %853 = vmatpush1.msra.mxu0 0.0
        %854 = vmatprep.subr.mxu0 0.0
        %855 = vmatpush1.msra.mxu0 0.0
        %856 = vmatprep.subr.mxu0 0.0
        %857 = vmatpush1.msra.mxu0 0.0
        %858 = vmatprep.subr.mxu0 0.0
        %859 = vmatpush1.msra.mxu0 0.0
        %860 = vmatprep.subr.mxu0 0.0
        %861 = vmatpush1.msra.mxu0 0.0
        %862 = vmatprep.subr.mxu0 0.0
        %863 = vmatpush1.msra.mxu0 0.0
        %864 = vmatprep.subr.mxu0 0.0
        %865 = vmatpush1.msra.mxu0 0.0
        %866 = vmatprep.subr.mxu0 0.0
        %867 = vmatpush1.msra.mxu0 0.0
        %868 = vmatprep.subr.mxu0 0.0
        %869 = vmatpush1.msra.mxu0 0.0
        %870 = vmatprep.subr.mxu0 0.0
        %871 = vmatpush1.msra.mxu0 0.0
        %872 = vmatprep.subr.mxu0 0.0
        %873 = vmatpush1.msra.mxu0 0.0
        %874 = vmatprep.mubr.f32.mxu0 0.0
        %875 = vmatmul.mubr.f32.gmra.mrb[0].mxu0 %v737
        %v876 = vpop.f32.mrb[0].mxu0
        %v877 = vadd.f32 0.0, %v876
        %v878 = vpop.f32.mrb[0].mxu0
        %v879 = vadd.f32 0.0, %v878
        %880 = vdwg.mxu0
        %881 = vmatprep.subr.mxu0 %v717
        %882 = vmatpush1.msra.mxu0 %v716
        %883 = vmatprep.subr.mxu0 %v725
        %884 = vmatpush1.msra.mxu0 %v724
        %885 = vmatprep.subr.mxu0 %v733
        %886 = vmatpush1.msra.mxu0 %v732
        %887 = vmatprep.subr.mxu0 0.0
        %888 = vmatpush1.msra.mxu0 0.0
        %889 = vmatprep.subr.mxu0 0.0
        %890 = vmatpush1.msra.mxu0 0.0
        %891 = vmatprep.subr.mxu0 0.0
        %892 = vmatpush1.msra.mxu0 0.0
        %893 = vmatprep.subr.mxu0 0.0
        %894 = vmatpush1.msra.mxu0 0.0
        %895 = vmatprep.subr.mxu0 0.0
        %896 = vmatpush1.msra.mxu0 0.0
        %897 = vmatprep.subr.mxu0 0.0
        %898 = vmatpush1.msra.mxu0 0.0
        %899 = vmatprep.subr.mxu0 0.0
        %900 = vmatpush1.msra.mxu0 0.0
        %901 = vmatprep.subr.mxu0 0.0
        %902 = vmatpush1.msra.mxu0 0.0
        %903 = vmatprep.subr.mxu0 0.0
        %904 = vmatpush1.msra.mxu0 0.0
        %905 = vmatprep.subr.mxu0 0.0
        %906 = vmatpush1.msra.mxu0 0.0
        %907 = vmatprep.subr.mxu0 0.0
        %908 = vmatpush1.msra.mxu0 0.0
        %909 = vmatprep.subr.mxu0 0.0
        %910 = vmatpush1.msra.mxu0 0.0
        %911 = vmatprep.subr.mxu0 0.0
        %912 = vmatpush1.msra.mxu0 0.0
        %913 = vmatprep.subr.mxu0 0.0
        %914 = vmatpush1.msra.mxu0 0.0
        %915 = vmatprep.subr.mxu0 0.0
        %916 = vmatpush1.msra.mxu0 0.0
        %917 = vmatprep.subr.mxu0 0.0
        %918 = vmatpush1.msra.mxu0 0.0
        %919 = vmatprep.subr.mxu0 0.0
        %920 = vmatpush1.msra.mxu0 0.0
        %921 = vmatprep.subr.mxu0 0.0
        %922 = vmatpush1.msra.mxu0 0.0
        %923 = vmatprep.subr.mxu0 0.0
        %924 = vmatpush1.msra.mxu0 0.0
        %925 = vmatprep.subr.mxu0 0.0
        %926 = vmatpush1.msra.mxu0 0.0
        %927 = vmatprep.subr.mxu0 0.0
        %928 = vmatpush1.msra.mxu0 0.0
        %929 = vmatprep.subr.mxu0 0.0
        %930 = vmatpush1.msra.mxu0 0.0
        %931 = vmatprep.subr.mxu0 0.0
        %932 = vmatpush1.msra.mxu0 0.0
        %933 = vmatprep.subr.mxu0 0.0
        %934 = vmatpush1.msra.mxu0 0.0
        %935 = vmatprep.subr.mxu0 0.0
        %936 = vmatpush1.msra.mxu0 0.0
        %937 = vmatprep.subr.mxu0 0.0
        %938 = vmatpush1.msra.mxu0 0.0
        %939 = vmatprep.subr.mxu0 0.0
        %940 = vmatpush1.msra.mxu0 0.0
        %941 = vmatprep.subr.mxu0 0.0
        %942 = vmatpush1.msra.mxu0 0.0
        %943 = vmatprep.subr.mxu0 0.0
        %944 = vmatpush1.msra.mxu0 0.0
        %945 = vmatprep.mubr.f32.mxu0 0.0
        %946 = vmatmul.mubr.f32.gmra.mrb[0].mxu0 %v737
        %v947 = vpop.f32.mrb[0].mxu0
        %v948 = vadd.f32 0.0, %v947
        %v949 = vpop.f32.mrb[0].mxu0
        %v950 = vadd.f32 0.0, %v949
        %951 = vdwg.mxu0
        %952 = vmatprep.subr.mxu0 %v719
        %953 = vmatpush1.msra.mxu0 %v718
        %954 = vmatprep.subr.mxu0 %v727
        %955 = vmatpush1.msra.mxu0 %v726
        %956 = vmatprep.subr.mxu0 %v735
        %957 = vmatpush1.msra.mxu0 %v734
        %958 = vmatprep.subr.mxu0 0.0
        %959 = vmatpush1.msra.mxu0 0.0
        %960 = vmatprep.subr.mxu0 0.0
        %961 = vmatpush1.msra.mxu0 0.0
        %962 = vmatprep.subr.mxu0 0.0
        %963 = vmatpush1.msra.mxu0 0.0
        %964 = vmatprep.subr.mxu0 0.0
        %965 = vmatpush1.msra.mxu0 0.0
        %966 = vmatprep.subr.mxu0 0.0
        %967 = vmatpush1.msra.mxu0 0.0
        %968 = vmatprep.subr.mxu0 0.0
        %969 = vmatpush1.msra.mxu0 0.0
        %970 = vmatprep.subr.mxu0 0.0
        %971 = vmatpush1.msra.mxu0 0.0
        %972 = vmatprep.subr.mxu0 0.0
        %973 = vmatpush1.msra.mxu0 0.0
        %974 = vmatprep.subr.mxu0 0.0
        %975 = vmatpush1.msra.mxu0 0.0
        %976 = vmatprep.subr.mxu0 0.0
        %977 = vmatpush1.msra.mxu0 0.0
        %978 = vmatprep.subr.mxu0 0.0
        %979 = vmatpush1.msra.mxu0 0.0
        %980 = vmatprep.subr.mxu0 0.0
        %981 = vmatpush1.msra.mxu0 0.0
        %982 = vmatprep.subr.mxu0 0.0
        %983 = vmatpush1.msra.mxu0 0.0
        %984 = vmatprep.subr.mxu0 0.0
        %985 = vmatpush1.msra.mxu0 0.0
        %986 = vmatprep.subr.mxu0 0.0
        %987 = vmatpush1.msra.mxu0 0.0
        %988 = vmatprep.subr.mxu0 0.0
        %989 = vmatpush1.msra.mxu0 0.0
        %990 = vmatprep.subr.mxu0 0.0
        %991 = vmatpush1.msra.mxu0 0.0
        %992 = vmatprep.subr.mxu0 0.0
        %993 = vmatpush1.msra.mxu0 0.0
        %994 = vmatprep.subr.mxu0 0.0
        %995 = vmatpush1.msra.mxu0 0.0
        %996 = vmatprep.subr.mxu0 0.0
        %997 = vmatpush1.msra.mxu0 0.0
        %998 = vmatprep.subr.mxu0 0.0
        %999 = vmatpush1.msra.mxu0 0.0
        %1000 = vmatprep.subr.mxu0 0.0
        %1001 = vmatpush1.msra.mxu0 0.0
        %1002 = vmatprep.subr.mxu0 0.0
        %1003 = vmatpush1.msra.mxu0 0.0
        %1004 = vmatprep.subr.mxu0 0.0
        %1005 = vmatpush1.msra.mxu0 0.0
        %1006 = vmatprep.subr.mxu0 0.0
        %1007 = vmatpush1.msra.mxu0 0.0
        %1008 = vmatprep.subr.mxu0 0.0
        %1009 = vmatpush1.msra.mxu0 0.0
        %1010 = vmatprep.subr.mxu0 0.0
        %1011 = vmatpush1.msra.mxu0 0.0
        %1012 = vmatprep.subr.mxu0 0.0
        %1013 = vmatpush1.msra.mxu0 0.0
        %1014 = vmatprep.subr.mxu0 0.0
        %1015 = vmatpush1.msra.mxu0 0.0
        %1016 = vmatprep.mubr.f32.mxu0 0.0
        %1017 = vmatmul.mubr.f32.gmra.mrb[0].mxu0 %v737
        %v1018 = vpop.f32.mrb[0].mxu0
        %v1019 = vadd.f32 0.0, %v1018
        %v1020 = vpop.f32.mrb[0].mxu0
        %v1021 = vadd.f32 0.0, %v1020
        %1022 = vdwg.mxu0
        %v1023 = vld [vmem:[#allocation5] sm:$0xff]
        %v1024 = vld [vmem:[#allocation5 + $0x8] sm:$0xff]
        %v1025 = vld [vmem:[#allocation5 + $0x10] sm:$0xff]
        %v1026 = vld [vmem:[#allocation5 + $0x18] sm:$0xff]
        %v1027 = vld [vmem:[#allocation5 + $0x20] sm:$0xff]
        %v1028 = vld [vmem:[#allocation5 + $0x28] sm:$0xff]
        %v1029 = vld [vmem:[#allocation5 + $0x30] sm:$0xff]
        %v1030 = vld [vmem:[#allocation5 + $0x38] sm:$0xff]
        %v1031 = vadd.f32 %v1023, %v806
        %v1032 = vadd.f32 %v1024, %v808
        %v1033 = vadd.f32 %v1025, %v877
        %v1034 = vadd.f32 %v1026, %v879
        %v1035 = vadd.f32 %v1027, %v948
        %v1036 = vadd.f32 %v1028, %v950
        %v1037 = vadd.f32 %v1029, %v1019
        %v1038 = vadd.f32 %v1030, %v1021
        %1039 = vst [vmem:[#allocation5] sm:$0xff] %v1031
        %1040 = vst [vmem:[#allocation5 + $0x8] sm:$0xff] %v1032
        %1041 = vst [vmem:[#allocation5 + $0x10] sm:$0xff] %v1033
        %1042 = vst [vmem:[#allocation5 + $0x18] sm:$0xff] %v1034
        %1043 = vst [vmem:[#allocation5 + $0x20] sm:$0xff] %v1035
        %1044 = vst [vmem:[#allocation5 + $0x28] sm:$0xff] %v1036
        %1045 = vst [vmem:[#allocation5 + $0x30] sm:$0xff] %v1037
        %1046 = vst [vmem:[#allocation5 + $0x38] sm:$0xff] %v1038
        %s1047 = scalar_lea.vmem [#allocation6], 16
        %v1048 = vld [vmem:[%s1047] sm:$0xff]
        %v1049 = vld [vmem:[#allocation4 + $0x10] sm:$0xff]
        %v1050 = vld [vmem:[#allocation4 + $0x18] sm:$0xff]
        %v1051 = vld [vmem:[#allocation4 + $0x20] sm:$0xff]
        %v1052 = vld [vmem:[#allocation4 + $0x28] sm:$0xff]
        %v1053 = vld [vmem:[#allocation4 + $0x30] sm:$0xff]
        %v1054 = vld [vmem:[#allocation4 + $0x38] sm:$0xff]
        %v1055 = vld [vmem:[#allocation4 + $0x40] sm:$0xff]
        %v1056 = vld [vmem:[#allocation4 + $0x48] sm:$0xff]
        %v1057 = vld [vmem:[#allocation4 + $0x60] sm:$0xff]
        %v1058 = vld [vmem:[#allocation4 + $0x68] sm:$0xff]
        %v1059 = vld [vmem:[#allocation4 + $0x70] sm:$0xff]
        %v1060 = vld [vmem:[#allocation4 + $0x78] sm:$0xff]
        %v1061 = vld [vmem:[#allocation4 + $0x80] sm:$0xff]
        %v1062 = vld [vmem:[#allocation4 + $0x88] sm:$0xff]
        %v1063 = vld [vmem:[#allocation4 + $0x90] sm:$0xff]
        %v1064 = vld [vmem:[#allocation4 + $0x98] sm:$0xff]
        %v1065 = vld [vmem:[#allocation4 + $0xb0] sm:$0xff]
        %v1066 = vld [vmem:[#allocation4 + $0xb8] sm:$0xff]
        %v1067 = vld [vmem:[#allocation4 + $0xc0] sm:$0xff]
        %v1068 = vld [vmem:[#allocation4 + $0xc8] sm:$0xff]
        %v1069 = vld [vmem:[#allocation4 + $0xd0] sm:$0xff]
        %v1070 = vld [vmem:[#allocation4 + $0xd8] sm:$0xff]
        %v1071 = vld [vmem:[#allocation4 + $0xe0] sm:$0xff]
        %v1072 = vld [vmem:[#allocation4 + $0xe8] sm:$0xff]
        %v1074 = vsel %vm414, %v1048, 0
        %1076 = vmatprep.subr.mxu0 %v1050
        %1077 = vmatpush1.msra.mxu0 %v1049
        %1078 = vmatprep.subr.mxu0 %v1058
        %1079 = vmatpush1.msra.mxu0 %v1057
        %1080 = vmatprep.subr.mxu0 %v1066
        %1081 = vmatpush1.msra.mxu0 %v1065
        %1082 = vmatprep.subr.mxu0 0.0
        %1083 = vmatpush1.msra.mxu0 0.0
        %1084 = vmatprep.subr.mxu0 0.0
        %1085 = vmatpush1.msra.mxu0 0.0
        %1086 = vmatprep.subr.mxu0 0.0
        %1087 = vmatpush1.msra.mxu0 0.0
        %1088 = vmatprep.subr.mxu0 0.0
        %1089 = vmatpush1.msra.mxu0 0.0
        %1090 = vmatprep.subr.mxu0 0.0
        %1091 = vmatpush1.msra.mxu0 0.0
        %1092 = vmatprep.subr.mxu0 0.0
        %1093 = vmatpush1.msra.mxu0 0.0
        %1094 = vmatprep.subr.mxu0 0.0
        %1095 = vmatpush1.msra.mxu0 0.0
        %1096 = vmatprep.subr.mxu0 0.0
        %1097 = vmatpush1.msra.mxu0 0.0
        %1098 = vmatprep.subr.mxu0 0.0
        %1099 = vmatpush1.msra.mxu0 0.0
        %1100 = vmatprep.subr.mxu0 0.0
        %1101 = vmatpush1.msra.mxu0 0.0
        %1102 = vmatprep.subr.mxu0 0.0
        %1103 = vmatpush1.msra.mxu0 0.0
        %1104 = vmatprep.subr.mxu0 0.0
        %1105 = vmatpush1.msra.mxu0 0.0
        %1106 = vmatprep.subr.mxu0 0.0
        %1107 = vmatpush1.msra.mxu0 0.0
        %1108 = vmatprep.subr.mxu0 0.0
        %1109 = vmatpush1.msra.mxu0 0.0
        %1110 = vmatprep.subr.mxu0 0.0
        %1111 = vmatpush1.msra.mxu0 0.0
        %1112 = vmatprep.subr.mxu0 0.0
        %1113 = vmatpush1.msra.mxu0 0.0
        %1114 = vmatprep.subr.mxu0 0.0
        %1115 = vmatpush1.msra.mxu0 0.0
        %1116 = vmatprep.subr.mxu0 0.0
        %1117 = vmatpush1.msra.mxu0 0.0
        %1118 = vmatprep.subr.mxu0 0.0
        %1119 = vmatpush1.msra.mxu0 0.0
        %1120 = vmatprep.subr.mxu0 0.0
        %1121 = vmatpush1.msra.mxu0 0.0
        %1122 = vmatprep.subr.mxu0 0.0
        %1123 = vmatpush1.msra.mxu0 0.0
        %1124 = vmatprep.subr.mxu0 0.0
        %1125 = vmatpush1.msra.mxu0 0.0
        %1126 = vmatprep.subr.mxu0 0.0
        %1127 = vmatpush1.msra.mxu0 0.0
        %1128 = vmatprep.subr.mxu0 0.0
        %1129 = vmatpush1.msra.mxu0 0.0
        %1130 = vmatprep.subr.mxu0 0.0
        %1131 = vmatpush1.msra.mxu0 0.0
        %1132 = vmatprep.subr.mxu0 0.0
        %1133 = vmatpush1.msra.mxu0 0.0
        %1134 = vmatprep.subr.mxu0 0.0
        %1135 = vmatpush1.msra.mxu0 0.0
        %1136 = vmatprep.subr.mxu0 0.0
        %1137 = vmatpush1.msra.mxu0 0.0
        %1138 = vmatprep.subr.mxu0 0.0
        %1139 = vmatpush1.msra.mxu0 0.0
        %1140 = vmatprep.mubr.f32.mxu0 0.0
        %1141 = vmatmul.mubr.f32.gmra.mrb[0].mxu0 %v1074
        %v1142 = vpop.f32.mrb[0].mxu0
        %v1143 = vadd.f32 0.0, %v1142
        %v1144 = vpop.f32.mrb[0].mxu0
        %v1145 = vadd.f32 0.0, %v1144
        %1146 = vdwg.mxu0
        %1147 = vmatprep.subr.mxu0 %v1052
        %1148 = vmatpush1.msra.mxu0 %v1051
        %1149 = vmatprep.subr.mxu0 %v1060
        %1150 = vmatpush1.msra.mxu0 %v1059
        %1151 = vmatprep.subr.mxu0 %v1068
        %1152 = vmatpush1.msra.mxu0 %v1067
        %1153 = vmatprep.subr.mxu0 0.0
        %1154 = vmatpush1.msra.mxu0 0.0
        %1155 = vmatprep.subr.mxu0 0.0
        %1156 = vmatpush1.msra.mxu0 0.0
        %1157 = vmatprep.subr.mxu0 0.0
        %1158 = vmatpush1.msra.mxu0 0.0
        %1159 = vmatprep.subr.mxu0 0.0
        %1160 = vmatpush1.msra.mxu0 0.0
        %1161 = vmatprep.subr.mxu0 0.0
        %1162 = vmatpush1.msra.mxu0 0.0
        %1163 = vmatprep.subr.mxu0 0.0
        %1164 = vmatpush1.msra.mxu0 0.0
        %1165 = vmatprep.subr.mxu0 0.0
        %1166 = vmatpush1.msra.mxu0 0.0
        %1167 = vmatprep.subr.mxu0 0.0
        %1168 = vmatpush1.msra.mxu0 0.0
        %1169 = vmatprep.subr.mxu0 0.0
        %1170 = vmatpush1.msra.mxu0 0.0
        %1171 = vmatprep.subr.mxu0 0.0
        %1172 = vmatpush1.msra.mxu0 0.0
        %1173 = vmatprep.subr.mxu0 0.0
        %1174 = vmatpush1.msra.mxu0 0.0
        %1175 = vmatprep.subr.mxu0 0.0
        %1176 = vmatpush1.msra.mxu0 0.0
        %1177 = vmatprep.subr.mxu0 0.0
        %1178 = vmatpush1.msra.mxu0 0.0
        %1179 = vmatprep.subr.mxu0 0.0
        %1180 = vmatpush1.msra.mxu0 0.0
        %1181 = vmatprep.subr.mxu0 0.0
        %1182 = vmatpush1.msra.mxu0 0.0
        %1183 = vmatprep.subr.mxu0 0.0
        %1184 = vmatpush1.msra.mxu0 0.0
        %1185 = vmatprep.subr.mxu0 0.0
        %1186 = vmatpush1.msra.mxu0 0.0
        %1187 = vmatprep.subr.mxu0 0.0
        %1188 = vmatpush1.msra.mxu0 0.0
        %1189 = vmatprep.subr.mxu0 0.0
        %1190 = vmatpush1.msra.mxu0 0.0
        %1191 = vmatprep.subr.mxu0 0.0
        %1192 = vmatpush1.msra.mxu0 0.0
        %1193 = vmatprep.subr.mxu0 0.0
        %1194 = vmatpush1.msra.mxu0 0.0
        %1195 = vmatprep.subr.mxu0 0.0
        %1196 = vmatpush1.msra.mxu0 0.0
        %1197 = vmatprep.subr.mxu0 0.0
        %1198 = vmatpush1.msra.mxu0 0.0
        %1199 = vmatprep.subr.mxu0 0.0
        %1200 = vmatpush1.msra.mxu0 0.0
        %1201 = vmatprep.subr.mxu0 0.0
        %1202 = vmatpush1.msra.mxu0 0.0
        %1203 = vmatprep.subr.mxu0 0.0
        %1204 = vmatpush1.msra.mxu0 0.0
        %1205 = vmatprep.subr.mxu0 0.0
        %1206 = vmatpush1.msra.mxu0 0.0
        %1207 = vmatprep.subr.mxu0 0.0
        %1208 = vmatpush1.msra.mxu0 0.0
        %1209 = vmatprep.subr.mxu0 0.0
        %1210 = vmatpush1.msra.mxu0 0.0
        %1211 = vmatprep.mubr.f32.mxu0 0.0
        %1212 = vmatmul.mubr.f32.gmra.mrb[0].mxu0 %v1074
        %v1213 = vpop.f32.mrb[0].mxu0
        %v1214 = vadd.f32 0.0, %v1213
        %v1215 = vpop.f32.mrb[0].mxu0
        %v1216 = vadd.f32 0.0, %v1215
        %1217 = vdwg.mxu0
        %1218 = vmatprep.subr.mxu0 %v1054
        %1219 = vmatpush1.msra.mxu0 %v1053
        %1220 = vmatprep.subr.mxu0 %v1062
        %1221 = vmatpush1.msra.mxu0 %v1061
        %1222 = vmatprep.subr.mxu0 %v1070
        %1223 = vmatpush1.msra.mxu0 %v1069
        %1224 = vmatprep.subr.mxu0 0.0
        %1225 = vmatpush1.msra.mxu0 0.0
        %1226 = vmatprep.subr.mxu0 0.0
        %1227 = vmatpush1.msra.mxu0 0.0
        %1228 = vmatprep.subr.mxu0 0.0
        %1229 = vmatpush1.msra.mxu0 0.0
        %1230 = vmatprep.subr.mxu0 0.0
        %1231 = vmatpush1.msra.mxu0 0.0
        %1232 = vmatprep.subr.mxu0 0.0
        %1233 = vmatpush1.msra.mxu0 0.0
        %1234 = vmatprep.subr.mxu0 0.0
        %1235 = vmatpush1.msra.mxu0 0.0
        %1236 = vmatprep.subr.mxu0 0.0
        %1237 = vmatpush1.msra.mxu0 0.0
        %1238 = vmatprep.subr.mxu0 0.0
        %1239 = vmatpush1.msra.mxu0 0.0
        %1240 = vmatprep.subr.mxu0 0.0
        %1241 = vmatpush1.msra.mxu0 0.0
        %1242 = vmatprep.subr.mxu0 0.0
        %1243 = vmatpush1.msra.mxu0 0.0
        %1244 = vmatprep.subr.mxu0 0.0
        %1245 = vmatpush1.msra.mxu0 0.0
        %1246 = vmatprep.subr.mxu0 0.0
        %1247 = vmatpush1.msra.mxu0 0.0
        %1248 = vmatprep.subr.mxu0 0.0
        %1249 = vmatpush1.msra.mxu0 0.0
        %1250 = vmatprep.subr.mxu0 0.0
        %1251 = vmatpush1.msra.mxu0 0.0
        %1252 = vmatprep.subr.mxu0 0.0
        %1253 = vmatpush1.msra.mxu0 0.0
        %1254 = vmatprep.subr.mxu0 0.0
        %1255 = vmatpush1.msra.mxu0 0.0
        %1256 = vmatprep.subr.mxu0 0.0
        %1257 = vmatpush1.msra.mxu0 0.0
        %1258 = vmatprep.subr.mxu0 0.0
        %1259 = vmatpush1.msra.mxu0 0.0
        %1260 = vmatprep.subr.mxu0 0.0
        %1261 = vmatpush1.msra.mxu0 0.0
        %1262 = vmatprep.subr.mxu0 0.0
        %1263 = vmatpush1.msra.mxu0 0.0
        %1264 = vmatprep.subr.mxu0 0.0
        %1265 = vmatpush1.msra.mxu0 0.0
        %1266 = vmatprep.subr.mxu0 0.0
        %1267 = vmatpush1.msra.mxu0 0.0
        %1268 = vmatprep.subr.mxu0 0.0
        %1269 = vmatpush1.msra.mxu0 0.0
        %1270 = vmatprep.subr.mxu0 0.0
        %1271 = vmatpush1.msra.mxu0 0.0
        %1272 = vmatprep.subr.mxu0 0.0
        %1273 = vmatpush1.msra.mxu0 0.0
        %1274 = vmatprep.subr.mxu0 0.0
        %1275 = vmatpush1.msra.mxu0 0.0
        %1276 = vmatprep.subr.mxu0 0.0
        %1277 = vmatpush1.msra.mxu0 0.0
        %1278 = vmatprep.subr.mxu0 0.0
        %1279 = vmatpush1.msra.mxu0 0.0
        %1280 = vmatprep.subr.mxu0 0.0
        %1281 = vmatpush1.msra.mxu0 0.0
        %1282 = vmatprep.mubr.f32.mxu0 0.0
        %1283 = vmatmul.mubr.f32.gmra.mrb[0].mxu0 %v1074
        %v1284 = vpop.f32.mrb[0].mxu0
        %v1285 = vadd.f32 0.0, %v1284
        %v1286 = vpop.f32.mrb[0].mxu0
        %v1287 = vadd.f32 0.0, %v1286
        %1288 = vdwg.mxu0
        %1289 = vmatprep.subr.mxu0 %v1056
        %1290 = vmatpush1.msra.mxu0 %v1055
        %1291 = vmatprep.subr.mxu0 %v1064
        %1292 = vmatpush1.msra.mxu0 %v1063
        %1293 = vmatprep.subr.mxu0 %v1072
        %1294 = vmatpush1.msra.mxu0 %v1071
        %1295 = vmatprep.subr.mxu0 0.0
        %1296 = vmatpush1.msra.mxu0 0.0
        %1297 = vmatprep.subr.mxu0 0.0
        %1298 = vmatpush1.msra.mxu0 0.0
        %1299 = vmatprep.subr.mxu0 0.0
        %1300 = vmatpush1.msra.mxu0 0.0
        %1301 = vmatprep.subr.mxu0 0.0
        %1302 = vmatpush1.msra.mxu0 0.0
        %1303 = vmatprep.subr.mxu0 0.0
        %1304 = vmatpush1.msra.mxu0 0.0
        %1305 = vmatprep.subr.mxu0 0.0
        %1306 = vmatpush1.msra.mxu0 0.0
        %1307 = vmatprep.subr.mxu0 0.0
        %1308 = vmatpush1.msra.mxu0 0.0
        %1309 = vmatprep.subr.mxu0 0.0
        %1310 = vmatpush1.msra.mxu0 0.0
        %1311 = vmatprep.subr.mxu0 0.0
        %1312 = vmatpush1.msra.mxu0 0.0
        %1313 = vmatprep.subr.mxu0 0.0
        %1314 = vmatpush1.msra.mxu0 0.0
        %1315 = vmatprep.subr.mxu0 0.0
        %1316 = vmatpush1.msra.mxu0 0.0
        %1317 = vmatprep.subr.mxu0 0.0
        %1318 = vmatpush1.msra.mxu0 0.0
        %1319 = vmatprep.subr.mxu0 0.0
        %1320 = vmatpush1.msra.mxu0 0.0
        %1321 = vmatprep.subr.mxu0 0.0
        %1322 = vmatpush1.msra.mxu0 0.0
        %1323 = vmatprep.subr.mxu0 0.0
        %1324 = vmatpush1.msra.mxu0 0.0
        %1325 = vmatprep.subr.mxu0 0.0
        %1326 = vmatpush1.msra.mxu0 0.0
        %1327 = vmatprep.subr.mxu0 0.0
        %1328 = vmatpush1.msra.mxu0 0.0
        %1329 = vmatprep.subr.mxu0 0.0
        %1330 = vmatpush1.msra.mxu0 0.0
        %1331 = vmatprep.subr.mxu0 0.0
        %1332 = vmatpush1.msra.mxu0 0.0
        %1333 = vmatprep.subr.mxu0 0.0
        %1334 = vmatpush1.msra.mxu0 0.0
        %1335 = vmatprep.subr.mxu0 0.0
        %1336 = vmatpush1.msra.mxu0 0.0
        %1337 = vmatprep.subr.mxu0 0.0
        %1338 = vmatpush1.msra.mxu0 0.0
        %1339 = vmatprep.subr.mxu0 0.0
        %1340 = vmatpush1.msra.mxu0 0.0
        %1341 = vmatprep.subr.mxu0 0.0
        %1342 = vmatpush1.msra.mxu0 0.0
        %1343 = vmatprep.subr.mxu0 0.0
        %1344 = vmatpush1.msra.mxu0 0.0
        %1345 = vmatprep.subr.mxu0 0.0
        %1346 = vmatpush1.msra.mxu0 0.0
        %1347 = vmatprep.subr.mxu0 0.0
        %1348 = vmatpush1.msra.mxu0 0.0
        %1349 = vmatprep.subr.mxu0 0.0
        %1350 = vmatpush1.msra.mxu0 0.0
        %1351 = vmatprep.subr.mxu0 0.0
        %1352 = vmatpush1.msra.mxu0 0.0
        %1353 = vmatprep.mubr.f32.mxu0 0.0
        %1354 = vmatmul.mubr.f32.gmra.mrb[0].mxu0 %v1074
        %v1355 = vpop.f32.mrb[0].mxu0
        %v1356 = vadd.f32 0.0, %v1355
        %v1357 = vpop.f32.mrb[0].mxu0
        %v1358 = vadd.f32 0.0, %v1357
        %1359 = vdwg.mxu0
        %v1360 = vld [vmem:[#allocation5] sm:$0xff]
        %v1361 = vld [vmem:[#allocation5 + $0x8] sm:$0xff]
        %v1362 = vld [vmem:[#allocation5 + $0x10] sm:$0xff]
        %v1363 = vld [vmem:[#allocation5 + $0x18] sm:$0xff]
        %v1364 = vld [vmem:[#allocation5 + $0x20] sm:$0xff]
        %v1365 = vld [vmem:[#allocation5 + $0x28] sm:$0xff]
        %v1366 = vld [vmem:[#allocation5 + $0x30] sm:$0xff]
        %v1367 = vld [vmem:[#allocation5 + $0x38] sm:$0xff]
        %v1368 = vadd.f32 %v1360, %v1143
        %v1369 = vadd.f32 %v1361, %v1145
        %v1370 = vadd.f32 %v1362, %v1214
        %v1371 = vadd.f32 %v1363, %v1216
        %v1372 = vadd.f32 %v1364, %v1285
        %v1373 = vadd.f32 %v1365, %v1287
        %v1374 = vadd.f32 %v1366, %v1356
        %v1375 = vadd.f32 %v1367, %v1358
        %1376 = vst [vmem:[#allocation5] sm:$0xff] %v1368
        %1377 = vst [vmem:[#allocation5 + $0x8] sm:$0xff] %v1369
        %1378 = vst [vmem:[#allocation5 + $0x10] sm:$0xff] %v1370
        %1379 = vst [vmem:[#allocation5 + $0x18] sm:$0xff] %v1371
        %1380 = vst [vmem:[#allocation5 + $0x20] sm:$0xff] %v1372
        %1381 = vst [vmem:[#allocation5 + $0x28] sm:$0xff] %v1373
        %1382 = vst [vmem:[#allocation5 + $0x30] sm:$0xff] %v1374
        %1383 = vst [vmem:[#allocation5 + $0x38] sm:$0xff] %v1375
        %v1384 = vld [vmem:[#allocation5] sm:$0xff]
        %v1385 = vld [vmem:[#allocation5 + $0x8] sm:$0xff]
        %v1386 = vld [vmem:[#allocation5 + $0x10] sm:$0xff]
        %v1387 = vld [vmem:[#allocation5 + $0x18] sm:$0xff]
        %v1388 = vld [vmem:[#allocation5 + $0x20] sm:$0xff]
        %v1389 = vld [vmem:[#allocation5 + $0x28] sm:$0xff]
        %v1390 = vld [vmem:[#allocation5 + $0x30] sm:$0xff]
        %v1391 = vld [vmem:[#allocation5 + $0x38] sm:$0xff]
        %v1392 = vld [vmem:[%s2] sm:$0xff]
        %1394 = vset.pattern.permute.xlu0 0
        %1395 = vperm.xlu0 %1394, %v1392
        %v1396 = vpop.permute.xlu0 %1395
        %v1398 = vadd.f32 %v1384, %v1396
        %v1399 = vadd.f32 %v1385, %v1396
        %v1400 = vadd.f32 %v1386, %v1396
        %v1401 = vadd.f32 %v1387, %v1396
        %v1402 = vadd.f32 %v1388, %v1396
        %v1403 = vadd.f32 %v1389, %v1396
        %v1404 = vadd.f32 %v1390, %v1396
        %v1405 = vadd.f32 %v1391, %v1396
        %v1406 = vmax.f32 %v1398, 0.0
        %v1407 = vmax.f32 %v1399, 0.0
        %v1408 = vmax.f32 %v1400, 0.0
        %v1409 = vmax.f32 %v1401, 0.0
        %v1410 = vmax.f32 %v1402, 0.0
        %v1411 = vmax.f32 %v1403, 0.0
        %v1412 = vmax.f32 %v1404, 0.0
        %v1413 = vmax.f32 %v1405, 0.0
        %1414 = vst [vmem:[%s151] sm:$0xff] %v1406
        %1415 = vst [vmem:[%s151 + $0x8] sm:$0xff] %v1407
        %1416 = vst [vmem:[%s151 + $0x10] sm:$0xff] %v1408
        %1417 = vst [vmem:[%s151 + $0x18] sm:$0xff] %v1409
        %1418 = vst [vmem:[%s151 + $0x20] sm:$0xff] %v1410
        %1419 = vst [vmem:[%s151 + $0x28] sm:$0xff] %v1411
        %1420 = vst [vmem:[%s151 + $0x30] sm:$0xff] %v1412
        %1421 = vst [vmem:[%s151 + $0x38] sm:$0xff] %v1413
        %s1422 = sand.u32 %s82, 1
        %s1423 = scalar_lea.sflag [#allocation8], %s1422
        %s1424 = sand.u32 %s82, 1
        %s1425 = smul.addr %s1424, 64
        %s1426 = scalar_lea.vmem [#allocation9], %s1425
        // Predicated region
        $region49: #{tpu_custom_call.1} parent=27 // pred_check
          %p1427 = pneg %p92
        $region50: #{tpu_custom_call.1} parent=27 // pred_check_branch
          %1429 = sbr.rel (%p1427) target = $region52
        $region51: #{tpu_custom_call.1} parent=27 // pred_region
          %s1430 = smul.u32 8, %s23
          %s1432 = ssub.s32 1024, 1024
          %1433 = vsyncadd %s1423, %s1432
          %s1434 = smul.addr %s22, 16
          %s1435 = sadd.s32 %s1430, %s1434
          %s1436 = smul.addr %s1435, 128
          %s1437 = scalar_lea.hbm %s3, %s1436
          %s1439 = sshll.u32 %s1426, 4
          %s1440 = int_to_ptr.vmem [resolvable:$true] %s1439
          %1442 = dma.vmem_to_hbm [thread:$0]  %s1440, 1024, %s1437, %s1423
        $region52: #{tpu_custom_call.1} parent=27 // pred_fallthru
          _
      $region28: #{tpu_custom_call.1} parent=5 // pred_fallthru
        _
      %p1443 = scmp.le.s32.totalorder 2, %s13
      // Predicated region
      $region53: #{tpu_custom_call.1} parent=5 // pred_check
        %p1444 = pneg %p1443
      $region54: #{tpu_custom_call.1} parent=5 // pred_check_branch
        %1446 = sbr.rel (%p1444) target = $region56
      $region55: #{tpu_custom_call.1} parent=5 // pred_region
        %s1447 = ssub.s32 %s13, 2
        // Predicated region
        $region57: #{tpu_custom_call.1} parent=55 // pred_check
          %p1448 = pneg %p98
        $region58: #{tpu_custom_call.1} parent=55 // pred_check_branch
          %1450 = sbr.rel (%p1448) target = $region60
        $region59: #{tpu_custom_call.1} parent=55 // pred_region
          %s1451 = sand.u32 %s83, 1
          %s1452 = scalar_lea.sflag [#allocation8], %s1451
          %s1453 = sand.u32 %s83, 1
          %s1454 = smul.addr %s1453, 64
          %s1455 = scalar_lea.vmem [#allocation9], %s1454
          %1456 = dma.done %s1452, 1024
        $region60: #{tpu_custom_call.1} parent=55 // pred_fallthru
          _
      $region56: #{tpu_custom_call.1} parent=5 // pred_fallthru
        _
    $region6: #{tpu_custom_call.1} parent=1 // loop_footer
      %s17 = sadd.s32 1, %s13
    $region7: #{tpu_custom_call.1} parent=1 // loop_footer_branch
      %12 = sbr.rel target = $region3
    $region8: #{tpu_custom_call.1} parent=1 // loop_exit
      _
    %1457 = vsyncpa [#allocation7], 1
    %s1458 = scalar_lea.sflag [#allocation7], 1
    %1459 = vsyncpa %s1458, 1
    %1460 = vsyncpa [#allocation8], 1
    %s1461 = scalar_lea.sflag [#allocation8], 1
    %1462 = vsyncpa %s1461, 1
  %1463 = vsyncmov [#allocation3]
  %s1464 = vpop.sfrf %1463
  %p1465 = scmp.eq.s32.totalorder %s1464, 0
  %p1466 = pneg %p1465
  %1468 = shalt.err (%p1466)
  %s1469 = scalar_lea.sflag [#allocation3], 1
  %1470 = vsyncmov %s1469
  %s1471 = vpop.sfrf %1470
  %p1472 = scmp.eq.s32.totalorder %s1471, 0
  %p1473 = pneg %p1472
  %1475 = shalt.err (%p1473)

</llo_original>
